<compile_context>
chip_gen: v5e
topology: v5e:2x2
jax: 0.10.0
libtpu: 0.0.40
codegen_flags: <defaults>
</compile_context>

<pallas_src>
import functools

import jax
import jax.numpy as jnp
from jax import lax
from jax.experimental import pallas as pl
from jax.experimental.pallas import tpu as pltpu

HID1 = 64     # dense1 output width
HLSTM = 32    # per-direction LSTM hidden size
OUTW = 128    # lane-dense fused head output width

# fused gate layout (each slot is 2*HLSTM lanes = [fwd | bwd]):
#   [ i_f i_b | f_f f_b | o_f o_b | g_f g_b ]
# PyTorch weight order is [i | f | g | o]; sigmoid gates (i, f, o) are packed
# contiguously in lanes [0, 3*2*HLSTM) so one whole-slab tanh affine covers
# them uniformly.
_GATE_DST = (0, 1, 3, 2)   # source gate index (pytorch order) -> dest slot


def _make_kernel(T, Bp, Oc, Od):
    H = HLSTM
    G2 = 2 * H            # fused hidden width  (h = [h_f | h_b])
    GATES = 4 * G2        # fused gate width

    def kernel(x_ref, w1_ref, b1_ref, wxf_ref, wxb_ref, bsum_ref,
               whh_ref, whf_ref, whb_ref, bh_ref,
               out_ref, xsum_s, fwd_s, bwd_s):
        # ---- dense1 + ReLU (one MXU matmul over all (t, b) rows) ----
        hid = jnp.maximum(
            jnp.dot(x_ref[...], w1_ref[...], preferred_element_type=jnp.float32)
            + b1_ref[...], 0.0)                                   # (T*Bp, 64)

        # ---- hoisted input projections for BOTH directions (off-chain) ----
        xgf = jnp.dot(hid, wxf_ref[...], preferred_element_type=jnp.float32)
        xgb = jnp.dot(hid, wxb_ref[...], preferred_element_type=jnp.float32)

        # pre-sum fwd(t) + time-reversed bwd(T-1-t) + all four biases, so the
        # recurrence loads a single (Bp, GATES) slab per step.  The reversal
        # is whole 8-row (tile-aligned) block reindexing -- no lane shuffles.
        bsum = bsum_ref[...]
        for t in range(T):
            rf = t * Bp
            rb = (T - 1 - t) * Bp
            xsum_s[pl.ds(rf, Bp), :] = (xgf[rf:rf + Bp, :]
                                        + xgb[rb:rb + Bp, :] + bsum)

        # ---- per-lane activation affine (hoisted out of the loop) ----
        #   sigmoid lanes (i, f, o): 0.5 * tanh(0.5 * x) + 0.5
        #   tanh    lanes (g)      : 1.0 * tanh(1.0 * x) + 0.0
        lane = lax.broadcasted_iota(jnp.int32, (Bp, GATES), 1)
        is_sig = lane < 3 * G2
        a_scale = jnp.where(is_sig, 0.5, 1.0).astype(jnp.float32)
        a_shift = jnp.where(is_sig, 0.5, 0.0).astype(jnp.float32)

        whh = whh_ref[...]          # (64, 256) bf16 block-diag, vreg resident

        h = jnp.zeros((Bp, G2), jnp.float32)   # [h_f | h_b]
        c = jnp.zeros((Bp, G2), jnp.float32)   # [c_f | c_b]

        # ---- fused fwd+bwd recurrence, fully unrolled (static T) ----
        # fwd direction consumes/produces time t; bwd consumes/produces T-1-t.
        for t in range(T):
            rf = t * Bp
            rb = (T - 1 - t) * Bp
            xg = xsum_s[pl.ds(rf, Bp), :]                       # (Bp, 256) f32
            if t == 0:
                gates = xg                                      # h == 0
            else:
                gates = jnp.dot(h.astype(jnp.bfloat16), whh,
                                preferred_element_type=jnp.float32) + xg
            act = jnp.tanh(gates * a_scale) * a_scale + a_shift  # one EUP slab
            i = act[:, 0 * G2:1 * G2]
            f = act[:, 1 * G2:2 * G2]
            o = act[:, 2 * G2:3 * G2]
            g = act[:, 3 * G2:4 * G2]
            c = f * c + i * g
            h = o * jnp.tanh(c)
            # full-width writeback: fwd half valid in fwd_s, bwd half in bwd_s
            fwd_s[pl.ds(rf, Bp), :] = h
            bwd_s[pl.ds(rb, Bp), :] = h

        # ---- heads: ReLU + split fwd/bwd matmuls into one lane-dense slab ----
        # whf has rows H:2H zeroed, whb has rows 0:H zeroed, so the "junk"
        # halves stored above contribute exactly zero.
        raw = (jnp.dot(jnp.maximum(fwd_s[...], 0.0), whf_ref[...],
                       preferred_element_type=jnp.float32)
               + jnp.dot(jnp.maximum(bwd_s[...], 0.0), whb_ref[...],
                         preferred_element_type=jnp.float32)
               + bh_ref[...])                                   # (T*Bp, 128)

        lane_o = lax.broadcasted_iota(jnp.int32, raw.shape, 1)
        cont_m = lane_o < Oc
        disc_m = (lane_o >= Oc) & (lane_o < Oc + Od)

        # masked softmax over the discrete-head lanes
        lm = jnp.where(disc_m, raw, -1e30)
        m = jnp.max(lm, axis=-1, keepdims=True)
        e = jnp.exp(lm - m)                     # exactly 0 off the disc lanes
        s = jnp.sum(e, axis=-1, keepdims=True)
        r = pl.reciprocal(s, approx=True)       # EUP slot
        r = r * (2.0 - s * r)                   # one Newton step -> f32 accuracy
        soft = e * r

        out_ref[...] = jnp.where(cont_m, jnp.tanh(raw),
                                 jnp.where(disc_m, soft, raw))

    return kernel


def _scatter_gates(w, half):
    """Map a (rows, 4*H) block in PyTorch gate order [i|f|g|o] into the fused
    (rows, 8*H) interleaved layout [ i_f i_b | f_f f_b | o_f o_b | g_f g_b ]."""
    H = HLSTM
    rows = w.shape[0]
    out = jnp.zeros((rows, 8 * H), jnp.float32)
    for gsrc in range(4):
        lo = _GATE_DST[gsrc] * 2 * H + half * H
        out = out.at[:, lo:lo + H].set(w[:, gsrc * H:(gsrc + 1) * H])
    return out


def pack_actor_params(p):
    """One-time repacking of PyTorch-shaped weights into the fused kernel
    layouts.  Call once (outside the hot path) and reuse the result."""
    H = HLSTM
    Oc = p["w2c"].shape[0]
    Od = p["w2d"].shape[0]
    Din = p["w3"].shape[0]
    assert Oc + Od + Din <= OUTW

    w1t = p["w1"].T.astype(jnp.float32)                         # (Din, 64)
    b1 = p["b1"][None, :].astype(jnp.float32)                   # (1, 64)

    wxf = _scatter_gates(p["wih_f"].T.astype(jnp.float32), 0)   # (64, 256)
    wxb = _scatter_gates(p["wih_b"].T.astype(jnp.float32), 1)   # (64, 256)
    # both directions' (b_ih + b_hh) folded into one bias, added once off-chain
    bsum = (_scatter_gates((p["bih_f"] + p["bhh_f"])[None, :].astype(jnp.float32), 0)
            + _scatter_gates((p["bih_b"] + p["bhh_b"])[None, :].astype(jnp.float32), 1))

    whh = jnp.zeros((2 * H, 8 * H), jnp.float32)                # (64, 256)
    whh = whh.at[0:H, :].set(_scatter_gates(p["whh_f"].T.astype(jnp.float32), 0))
    whh = whh.at[H:2 * H, :].set(_scatter_gates(p["whh_b"].T.astype(jnp.float32), 1))
    whh = whh.astype(jnp.bfloat16)   # resident recurrence weight: single MXU pass

    # fused lane-dense heads: [cont | disc | next_state | zero pad], split into
    # a forward-rows half and a backward-rows half (other rows zeroed)
    w_heads = jnp.zeros((2 * H, OUTW), jnp.float32)
    w_heads = w_heads.at[:, 0:Oc].set(p["w2c"].T)
    w_heads = w_heads.at[:, Oc:Oc + Od].set(p["w2d"].T)
    w_heads = w_heads.at[:, Oc + Od:Oc + Od + Din].set(p["w3"].T)
    whf = w_heads.at[H:2 * H, :].set(0.0)      # consumes fwd_s lanes 0:H only
    whb = w_heads.at[0:H, :].set(0.0)          # consumes bwd_s lanes H:2H only
    bh = jnp.zeros((1, OUTW), jnp.float32)
    bh = bh.at[0, 0:Oc].set(p["b2c"])
    bh = bh.at[0, Oc:Oc + Od].set(p["b2d"])
    bh = bh.at[0, Oc + Od:Oc + Od + Din].set(p["b3"])

    return (w1t, b1, wxf, wxb, bsum, whh, whf, whb, bh)


@functools.partial(jax.jit, static_argnames=("out_dim",))
def actor_forward_pallas(obs, packed, out_dim):
    """obs: (B, T, input_dim) f32; packed = pack_actor_params(p).
    Returns (policy (B,T,Oc+Od), next_state (B,T,input_dim))."""
    B, T, Din = obs.shape
    Oc, Od = out_dim
    H = HLSTM
    Bp = ((B + 7) // 8) * 8               # pad batch to a sublane multiple

    # time-major, batch padded, flattened to a 2-D slab (inside the same jit)
    x = jnp.transpose(obs, (1, 0, 2)).astype(jnp.float32)       # (T, B, Din)
    x = jnp.pad(x, ((0, 0), (0, Bp - B), (0, 0)))               # (T, Bp, Din)
    x2d = x.reshape(T * Bp, Din)

    kernel = _make_kernel(T, Bp, Oc, Od)
    vmem = pl.BlockSpec(memory_space=pltpu.MemorySpace.VMEM)

    out2d = pl.pallas_call(
        kernel,
        out_shape=jax.ShapeDtypeStruct((T * Bp, OUTW), jnp.float32),
        in_specs=[vmem] * 10,
        out_specs=vmem,
        scratch_shapes=[pltpu.VMEM((T * Bp, 8 * H), jnp.float32),   # pre-summed x-gates
                        pltpu.VMEM((T * Bp, 2 * H), jnp.float32),   # fwd h slab
                        pltpu.VMEM((T * Bp, 2 * H), jnp.float32)],  # bwd h slab
    )(x2d, *packed)

    out = out2d.reshape(T, Bp, OUTW)[:, :B, :].transpose(1, 0, 2)   # (B, T, 128)
    policy = out[..., :Oc + Od]
    next_state = out[..., Oc + Od:Oc + Od + Din]
    return policy, next_state


# ---------------- pure-JAX reference (for verification) ----------------
def actor_forward_ref(obs, p):
    B, T, Din = obs.shape
    H = HLSTM
    hid = jax.nn.relu(obs @ p["w1"].T + p["b1"])  # (B, T, 64)

    def run_dir(wih, whh, bih, bhh, reverse):
        h = jnp.zeros((B, H), jnp.float32)
        c = jnp.zeros((B, H), jnp.float32)
        outs = [None] * T
        order = range(T - 1, -1, -1) if reverse else range(T)
        for t in order:
            g = hid[:, t, :] @ wih.T + h @ whh.T + bih + bhh
            i = jax.nn.sigmoid(g[:, :H])
            f = jax.nn.sigmoid(g[:, H:2 * H])
            gg = jnp.tanh(g[:, 2 * H:3 * H])
            o = jax.nn.sigmoid(g[:, 3 * H:4 * H])
            c = f * c + i * gg
            h = o * jnp.tanh(c)
            outs[t] = h
        return jnp.stack(outs, axis=1)  # (B, T, H)

    of = run_dir(p["wih_f"], p["whh_f"], p["bih_f"], p["bhh_f"], False)
    ob = run_dir(p["wih_b"], p["whh_b"], p["bih_b"], p["bhh_b"], True)
    lstm = jax.nn.relu(jnp.concatenate([of, ob], axis=-1))
    pc = jnp.tanh(lstm @ p["w2c"].T + p["b2c"])
    pd = jax.nn.softmax(lstm @ p["w2d"].T + p["b2d"], axis=-1)
    policy = jnp.concatenate([pc, pd], axis=-1)
    next_state = lstm @ p["w3"].T + p["b3"]
    return policy, next_state


def init_params(key, input_dim, out_dim):
    """Deterministic synthetic init (PyTorch-shaped weights)."""
    Oc, Od = out_dim
    H = HLSTM
    shapes = {
        "w1": (HID1, input_dim), "b1": (HID1,),
        "wih_f": (4 * H, HID1), "whh_f": (4 * H, H),
        "bih_f": (4 * H,), "bhh_f": (4 * H,),
        "wih_b": (4 * H, HID1), "whh_b": (4 * H, H),
        "bih_b": (4 * H,), "bhh_b": (4 * H,),
        "w2c": (Oc, HID1), "b2c": (Oc,),
        "w2d": (Od, HID1), "b2d": (Od,),
        "w3": (input_dim, HID1), "b3": (input_dim,),
    }
    params = {}
    keys = jax.random.split(key, len(shapes))
    for k, (name, shp) in zip(keys, sorted(shapes.items())):
        fan_in = shp[-1] if len(shp) > 1 else shp[0]
        bound = 1.0 / jnp.sqrt(jnp.float32(fan_in))
        params[name] = jax.random.uniform(
            k, shp, jnp.float32, minval=-bound, maxval=bound)
    return params


if __name__ == "__main__":
    B, T = 2, 8               # batch, sequence (nb_agents)
    input_dim = 16
    out_dim = (4, 5)          # (continuous head, discrete head)

    key = jax.random.PRNGKey(0)
    k_obs, k_par = jax.random.split(key)
    obs = jax.random.normal(k_obs, (B, T, input_dim), jnp.float32)
    params = init_params(k_par, input_dim, out_dim)

    # one-time weight repacking, hoisted out of the per-call path
    packed = jax.tree_util.tree_map(jax.block_until_ready,
                                    pack_actor_params(params))

    policy, next_state = actor_forward_pallas(obs, packed, out_dim)
    policy = jax.block_until_ready(policy)
    next_state = jax.block_until_ready(next_state)

    policy_ref, next_ref = actor_forward_ref(obs, params)

    assert policy.shape == (B, T, out_dim[0] + out_dim[1])
    assert next_state.shape == (B, T, input_dim)
    # bf16 MXU passes in the recurrence (and default matmul precision in the
    # reference) => relaxed-but-meaningful tolerance; values are O(0.1 - 1).
    assert jnp.allclose(policy, policy_ref, atol=2e-2, rtol=2e-2), "policy mismatch"
    assert jnp.allclose(next_state, next_ref, atol=2e-2, rtol=2e-2), "next_state mismatch"

    print("KERNEL_OK")
</pallas_src>

<mosaic_0001>
module attributes {stable_mosaic.version = 11 : i64} {
  func.func @kernel(%arg0: memref<64x16xf32, #tpu.memory_space<vmem>>, %arg1: memref<16x64xf32, #tpu.memory_space<vmem>>, %arg2: memref<1x64xf32, #tpu.memory_space<vmem>>, %arg3: memref<64x256xf32, #tpu.memory_space<vmem>>, %arg4: memref<64x256xf32, #tpu.memory_space<vmem>>, %arg5: memref<1x256xf32, #tpu.memory_space<vmem>>, %arg6: memref<64x256xbf16, #tpu.memory_space<vmem>>, %arg7: memref<64x128xf32, #tpu.memory_space<vmem>>, %arg8: memref<64x128xf32, #tpu.memory_space<vmem>>, %arg9: memref<1x128xf32, #tpu.memory_space<vmem>>, %arg10: memref<64x128xf32, #tpu.memory_space<vmem>>, %arg11: memref<64x256xf32, #tpu.memory_space<vmem>>, %arg12: memref<64x64xf32, #tpu.memory_space<vmem>>, %arg13: memref<64x64xf32, #tpu.memory_space<vmem>>) attributes {dimension_semantics = [], scalar_prefetch = 0 : i64, scratch_operands = 3 : i64, tpu.core_type = #tpu.core_type<tc>} {
    %c0 = arith.constant 0 : index
    %c0_0 = arith.constant 0 : index
    %0 = vector.load %arg0[%c0, %c0_0] : memref<64x16xf32, #tpu.memory_space<vmem>>, vector<64x16xf32>
    %c0_1 = arith.constant 0 : index
    %c0_2 = arith.constant 0 : index
    %1 = vector.load %arg1[%c0_1, %c0_2] : memref<16x64xf32, #tpu.memory_space<vmem>>, vector<16x64xf32>
    %cst = arith.constant dense<0.000000e+00> : vector<64x64xf32>
    %2 = tpu.matmul %0, %1, %cst {dimension_numbers = #tpu.dot_dimension_numbers<[1], [0], [0], [1], [0, 0, 1, 1], [], []>} : vector<64x16xf32>, vector<16x64xf32>, vector<64x64xf32> -> vector<64x64xf32>
    %c0_3 = arith.constant 0 : index
    %c0_4 = arith.constant 0 : index
    %3 = vector.load %arg2[%c0_3, %c0_4] : memref<1x64xf32, #tpu.memory_space<vmem>>, vector<1x64xf32>
    %4 = vector.broadcast %3 : vector<1x64xf32> to vector<64x64xf32>
    %5 = arith.addf %2, %4 : vector<64x64xf32>
    %cst_5 = arith.constant 0.000000e+00 : f32
    %6 = vector.broadcast %cst_5 : f32 to vector<64x64xf32>
    %7 = arith.maximumf %5, %6 : vector<64x64xf32>
    %c0_6 = arith.constant 0 : index
    %c0_7 = arith.constant 0 : index
    %8 = vector.load %arg3[%c0_6, %c0_7] : memref<64x256xf32, #tpu.memory_space<vmem>>, vector<64x256xf32>
    %cst_8 = arith.constant dense<0.000000e+00> : vector<64x256xf32>
    %9 = tpu.matmul %7, %8, %cst_8 {dimension_numbers = #tpu.dot_dimension_numbers<[1], [0], [0], [1], [0, 0, 1, 1], [], []>} : vector<64x64xf32>, vector<64x256xf32>, vector<64x256xf32> -> vector<64x256xf32>
    %c0_9 = arith.constant 0 : index
    %c0_10 = arith.constant 0 : index
    %10 = vector.load %arg4[%c0_9, %c0_10] : memref<64x256xf32, #tpu.memory_space<vmem>>, vector<64x256xf32>
    %cst_11 = arith.constant dense<0.000000e+00> : vector<64x256xf32>
    %11 = tpu.matmul %7, %10, %cst_11 {dimension_numbers = #tpu.dot_dimension_numbers<[1], [0], [0], [1], [0, 0, 1, 1], [], []>} : vector<64x64xf32>, vector<64x256xf32>, vector<64x256xf32> -> vector<64x256xf32>
    %c0_12 = arith.constant 0 : index
    %c0_13 = arith.constant 0 : index
    %12 = vector.load %arg5[%c0_12, %c0_13] : memref<1x256xf32, #tpu.memory_space<vmem>>, vector<1x256xf32>
    %13 = vector.extract_strided_slice %9 {offsets = [0, 0], sizes = [8, 256], strides = [1, 1]} : vector<64x256xf32> to vector<8x256xf32>
    %14 = vector.extract_strided_slice %11 {offsets = [56, 0], sizes = [8, 256], strides = [1, 1]} : vector<64x256xf32> to vector<8x256xf32>
    %15 = arith.addf %13, %14 : vector<8x256xf32>
    %16 = vector.broadcast %12 : vector<1x256xf32> to vector<8x256xf32>
    %17 = arith.addf %15, %16 : vector<8x256xf32>
    %c0_14 = arith.constant 0 : index
    %c0_15 = arith.constant 0 : index
    %18 = vector.load %arg11[%c0_14, %c0_15] : memref<64x256xf32, #tpu.memory_space<vmem>>, vector<8x256xf32>
    tpu.vector_store %arg11[%c0_14, %c0_15], %17 {strides = array<i32>} : memref<64x256xf32, #tpu.memory_space<vmem>>, vector<8x256xf32>,
    %19 = vector.extract_strided_slice %9 {offsets = [8, 0], sizes = [8, 256], strides = [1, 1]} : vector<64x256xf32> to vector<8x256xf32>
    %20 = vector.extract_strided_slice %11 {offsets = [48, 0], sizes = [8, 256], strides = [1, 1]} : vector<64x256xf32> to vector<8x256xf32>
    %21 = arith.addf %19, %20 : vector<8x256xf32>
    %22 = vector.broadcast %12 : vector<1x256xf32> to vector<8x256xf32>
    %23 = arith.addf %21, %22 : vector<8x256xf32>
    %c8 = arith.constant 8 : index
    %c0_16 = arith.constant 0 : index
    %24 = vector.load %arg11[%c8, %c0_16] : memref<64x256xf32, #tpu.memory_space<vmem>>, vector<8x256xf32>
    tpu.vector_store %arg11[%c8, %c0_16], %23 {strides = array<i32>} : memref<64x256xf32, #tpu.memory_space<vmem>>, vector<8x256xf32>,
    %25 = vector.extract_strided_slice %9 {offsets = [16, 0], sizes = [8, 256], strides = [1, 1]} : vector<64x256xf32> to vector<8x256xf32>
    %26 = vector.extract_strided_slice %11 {offsets = [40, 0], sizes = [8, 256], strides = [1, 1]} : vector<64x256xf32> to vector<8x256xf32>
    %27 = arith.addf %25, %26 : vector<8x256xf32>
    %28 = vector.broadcast %12 : vector<1x256xf32> to vector<8x256xf32>
    %29 = arith.addf %27, %28 : vector<8x256xf32>
    %c16 = arith.constant 16 : index
    %c0_17 = arith.constant 0 : index
    %30 = vector.load %arg11[%c16, %c0_17] : memref<64x256xf32, #tpu.memory_space<vmem>>, vector<8x256xf32>
    tpu.vector_store %arg11[%c16, %c0_17], %29 {strides = array<i32>} : memref<64x256xf32, #tpu.memory_space<vmem>>, vector<8x256xf32>,
    %31 = vector.extract_strided_slice %9 {offsets = [24, 0], sizes = [8, 256], strides = [1, 1]} : vector<64x256xf32> to vector<8x256xf32>
    %32 = vector.extract_strided_slice %11 {offsets = [32, 0], sizes = [8, 256], strides = [1, 1]} : vector<64x256xf32> to vector<8x256xf32>
    %33 = arith.addf %31, %32 : vector<8x256xf32>
    %34 = vector.broadcast %12 : vector<1x256xf32> to vector<8x256xf32>
    %35 = arith.addf %33, %34 : vector<8x256xf32>
    %c24 = arith.constant 24 : index
    %c0_18 = arith.constant 0 : index
    %36 = vector.load %arg11[%c24, %c0_18] : memref<64x256xf32, #tpu.memory_space<vmem>>, vector<8x256xf32>
    tpu.vector_store %arg11[%c24, %c0_18], %35 {strides = array<i32>} : memref<64x256xf32, #tpu.memory_space<vmem>>, vector<8x256xf32>,
    %37 = vector.extract_strided_slice %9 {offsets = [32, 0], sizes = [8, 256], strides = [1, 1]} : vector<64x256xf32> to vector<8x256xf32>
    %38 = vector.extract_strided_slice %11 {offsets = [24, 0], sizes = [8, 256], strides = [1, 1]} : vector<64x256xf32> to vector<8x256xf32>
    %39 = arith.addf %37, %38 : vector<8x256xf32>
    %40 = vector.broadcast %12 : vector<1x256xf32> to vector<8x256xf32>
    %41 = arith.addf %39, %40 : vector<8x256xf32>
    %c32 = arith.constant 32 : index
    %c0_19 = arith.constant 0 : index
    %42 = vector.load %arg11[%c32, %c0_19] : memref<64x256xf32, #tpu.memory_space<vmem>>, vector<8x256xf32>
    tpu.vector_store %arg11[%c32, %c0_19], %41 {strides = array<i32>} : memref<64x256xf32, #tpu.memory_space<vmem>>, vector<8x256xf32>,
    %43 = vector.extract_strided_slice %9 {offsets = [40, 0], sizes = [8, 256], strides = [1, 1]} : vector<64x256xf32> to vector<8x256xf32>
    %44 = vector.extract_strided_slice %11 {offsets = [16, 0], sizes = [8, 256], strides = [1, 1]} : vector<64x256xf32> to vector<8x256xf32>
    %45 = arith.addf %43, %44 : vector<8x256xf32>
    %46 = vector.broadcast %12 : vector<1x256xf32> to vector<8x256xf32>
    %47 = arith.addf %45, %46 : vector<8x256xf32>
    %c40 = arith.constant 40 : index
    %c0_20 = arith.constant 0 : index
    %48 = vector.load %arg11[%c40, %c0_20] : memref<64x256xf32, #tpu.memory_space<vmem>>, vector<8x256xf32>
    tpu.vector_store %arg11[%c40, %c0_20], %47 {strides = array<i32>} : memref<64x256xf32, #tpu.memory_space<vmem>>, vector<8x256xf32>,
    %49 = vector.extract_strided_slice %9 {offsets = [48, 0], sizes = [8, 256], strides = [1, 1]} : vector<64x256xf32> to vector<8x256xf32>
    %50 = vector.extract_strided_slice %11 {offsets = [8, 0], sizes = [8, 256], strides = [1, 1]} : vector<64x256xf32> to vector<8x256xf32>
    %51 = arith.addf %49, %50 : vector<8x256xf32>
    %52 = vector.broadcast %12 : vector<1x256xf32> to vector<8x256xf32>
    %53 = arith.addf %51, %52 : vector<8x256xf32>
    %c48 = arith.constant 48 : index
    %c0_21 = arith.constant 0 : index
    %54 = vector.load %arg11[%c48, %c0_21] : memref<64x256xf32, #tpu.memory_space<vmem>>, vector<8x256xf32>
    tpu.vector_store %arg11[%c48, %c0_21], %53 {strides = array<i32>} : memref<64x256xf32, #tpu.memory_space<vmem>>, vector<8x256xf32>,
    %55 = vector.extract_strided_slice %9 {offsets = [56, 0], sizes = [8, 256], strides = [1, 1]} : vector<64x256xf32> to vector<8x256xf32>
    %56 = vector.extract_strided_slice %11 {offsets = [0, 0], sizes = [8, 256], strides = [1, 1]} : vector<64x256xf32> to vector<8x256xf32>
    %57 = arith.addf %55, %56 : vector<8x256xf32>
    %58 = vector.broadcast %12 : vector<1x256xf32> to vector<8x256xf32>
    %59 = arith.addf %57, %58 : vector<8x256xf32>
    %c56 = arith.constant 56 : index
    %c0_22 = arith.constant 0 : index
    %60 = vector.load %arg11[%c56, %c0_22] : memref<64x256xf32, #tpu.memory_space<vmem>>, vector<8x256xf32>
    tpu.vector_store %arg11[%c56, %c0_22], %59 {strides = array<i32>} : memref<64x256xf32, #tpu.memory_space<vmem>>, vector<8x256xf32>,
    %61 = tpu.iota {dimensions = array<i32: 1>} : vector<8x256xi32>
    %c192_i32 = arith.constant 192 : i32
    %62 = vector.broadcast %c192_i32 : i32 to vector<8x256xi32>
    %63 = arith.cmpi slt, %61, %62 : vector<8x256xi32>
    %cst_23 = arith.constant 5.000000e-01 : f32
    %cst_24 = arith.constant 1.000000e+00 : f32
    %64 = vector.broadcast %cst_23 : f32 to vector<8x256xf32>
    %65 = vector.broadcast %cst_24 : f32 to vector<8x256xf32>
    %66 = arith.select %63, %64, %65 : vector<8x256xi1>, vector<8x256xf32>
    %cst_25 = arith.constant 5.000000e-01 : f32
    %cst_26 = arith.constant 0.000000e+00 : f32
    %67 = vector.broadcast %cst_25 : f32 to vector<8x256xf32>
    %68 = vector.broadcast %cst_26 : f32 to vector<8x256xf32>
    %69 = arith.select %63, %67, %68 : vector<8x256xi1>, vector<8x256xf32>
    %c0_27 = arith.constant 0 : index
    %c0_28 = arith.constant 0 : index
    %70 = vector.load %arg6[%c0_27, %c0_28] : memref<64x256xbf16, #tpu.memory_space<vmem>>, vector<64x256xbf16>
    %cst_29 = arith.constant 0.000000e+00 : f32
    %71 = vector.broadcast %cst_29 : f32 to vector<8x64xf32>
    %c0_30 = arith.constant 0 : index
    %c0_31 = arith.constant 0 : index
    %72 = vector.load %arg11[%c0_30, %c0_31] : memref<64x256xf32, #tpu.memory_space<vmem>>, vector<8x256xf32>
    %73 = arith.mulf %72, %66 : vector<8x256xf32>
    %74 = math.tanh %73 : vector<8x256xf32>
    %75 = arith.mulf %74, %66 : vector<8x256xf32>
    %76 = arith.addf %75, %69 : vector<8x256xf32>
    %77 = vector.extract_strided_slice %76 {offsets = [0, 0], sizes = [8, 64], strides = [1, 1]} : vector<8x256xf32> to vector<8x64xf32>
    %78 = vector.extract_strided_slice %76 {offsets = [0, 64], sizes = [8, 64], strides = [1, 1]} : vector<8x256xf32> to vector<8x64xf32>
    %79 = vector.extract_strided_slice %76 {offsets = [0, 128], sizes = [8, 64], strides = [1, 1]} : vector<8x256xf32> to vector<8x64xf32>
    %80 = vector.extract_strided_slice %76 {offsets = [0, 192], sizes = [8, 64], strides = [1, 1]} : vector<8x256xf32> to vector<8x64xf32>
    %81 = arith.mulf %78, %71 : vector<8x64xf32>
    %82 = arith.mulf %77, %80 : vector<8x64xf32>
    %83 = arith.addf %81, %82 : vector<8x64xf32>
    %84 = math.tanh %83 : vector<8x64xf32>
    %85 = arith.mulf %79, %84 : vector<8x64xf32>
    %c0_32 = arith.constant 0 : index
    %c0_33 = arith.constant 0 : index
    %86 = vector.load %arg12[%c0_32, %c0_33] : memref<64x64xf32, #tpu.memory_space<vmem>>, vector<8x64xf32>
    tpu.vector_store %arg12[%c0_32, %c0_33], %85 {strides = array<i32>} : memref<64x64xf32, #tpu.memory_space<vmem>>, vector<8x64xf32>,
    %c56_34 = arith.constant 56 : index
    %c0_35 = arith.constant 0 : index
    %87 = vector.load %arg13[%c56_34, %c0_35] : memref<64x64xf32, #tpu.memory_space<vmem>>, vector<8x64xf32>
    tpu.vector_store %arg13[%c56_34, %c0_35], %85 {strides = array<i32>} : memref<64x64xf32, #tpu.memory_space<vmem>>, vector<8x64xf32>,
    %c8_36 = arith.constant 8 : index
    %c0_37 = arith.constant 0 : index
    %88 = vector.load %arg11[%c8_36, %c0_37] : memref<64x256xf32, #tpu.memory_space<vmem>>, vector<8x256xf32>
    %89 = arith.truncf %85 : vector<8x64xf32> to vector<8x64xbf16>
    %cst_38 = arith.constant dense<0.000000e+00> : vector<8x256xf32>
    %90 = tpu.matmul %89, %70, %cst_38 {dimension_numbers = #tpu.dot_dimension_numbers<[1], [0], [0], [1], [0, 0, 1, 1], [], []>} : vector<8x64xbf16>, vector<64x256xbf16>, vector<8x256xf32> -> vector<8x256xf32>
    %91 = arith.addf %90, %88 : vector<8x256xf32>
    %92 = arith.mulf %91, %66 : vector<8x256xf32>
    %93 = math.tanh %92 : vector<8x256xf32>
    %94 = arith.mulf %93, %66 : vector<8x256xf32>
    %95 = arith.addf %94, %69 : vector<8x256xf32>
    %96 = vector.extract_strided_slice %95 {offsets = [0, 0], sizes = [8, 64], strides = [1, 1]} : vector<8x256xf32> to vector<8x64xf32>
    %97 = vector.extract_strided_slice %95 {offsets = [0, 64], sizes = [8, 64], strides = [1, 1]} : vector<8x256xf32> to vector<8x64xf32>
    %98 = vector.extract_strided_slice %95 {offsets = [0, 128], sizes = [8, 64], strides = [1, 1]} : vector<8x256xf32> to vector<8x64xf32>
    %99 = vector.extract_strided_slice %95 {offsets = [0, 192], sizes = [8, 64], strides = [1, 1]} : vector<8x256xf32> to vector<8x64xf32>
    %100 = arith.mulf %97, %83 : vector<8x64xf32>
    %101 = arith.mulf %96, %99 : vector<8x64xf32>
    %102 = arith.addf %100, %101 : vector<8x64xf32>
    %103 = math.tanh %102 : vector<8x64xf32>
    %104 = arith.mulf %98, %103 : vector<8x64xf32>
    %c8_39 = arith.constant 8 : index
    %c0_40 = arith.constant 0 : index
    %105 = vector.load %arg12[%c8_39, %c0_40] : memref<64x64xf32, #tpu.memory_space<vmem>>, vector<8x64xf32>
    tpu.vector_store %arg12[%c8_39, %c0_40], %104 {strides = array<i32>} : memref<64x64xf32, #tpu.memory_space<vmem>>, vector<8x64xf32>,
    %c48_41 = arith.constant 48 : index
    %c0_42 = arith.constant 0 : index
    %106 = vector.load %arg13[%c48_41, %c0_42] : memref<64x64xf32, #tpu.memory_space<vmem>>, vector<8x64xf32>
    tpu.vector_store %arg13[%c48_41, %c0_42], %104 {strides = array<i32>} : memref<64x64xf32, #tpu.memory_space<vmem>>, vector<8x64xf32>,
    %c16_43 = arith.constant 16 : index
    %c0_44 = arith.constant 0 : index
    %107 = vector.load %arg11[%c16_43, %c0_44] : memref<64x256xf32, #tpu.memory_space<vmem>>, vector<8x256xf32>
    %108 = arith.truncf %104 : vector<8x64xf32> to vector<8x64xbf16>
    %cst_45 = arith.constant dense<0.000000e+00> : vector<8x256xf32>
    %109 = tpu.matmul %108, %70, %cst_45 {dimension_numbers = #tpu.dot_dimension_numbers<[1], [0], [0], [1], [0, 0, 1, 1], [], []>} : vector<8x64xbf16>, vector<64x256xbf16>, vector<8x256xf32> -> vector<8x256xf32>
    %110 = arith.addf %109, %107 : vector<8x256xf32>
    %111 = arith.mulf %110, %66 : vector<8x256xf32>
    %112 = math.tanh %111 : vector<8x256xf32>
    %113 = arith.mulf %112, %66 : vector<8x256xf32>
    %114 = arith.addf %113, %69 : vector<8x256xf32>
    %115 = vector.extract_strided_slice %114 {offsets = [0, 0], sizes = [8, 64], strides = [1, 1]} : vector<8x256xf32> to vector<8x64xf32>
    %116 = vector.extract_strided_slice %114 {offsets = [0, 64], sizes = [8, 64], strides = [1, 1]} : vector<8x256xf32> to vector<8x64xf32>
    %117 = vector.extract_strided_slice %114 {offsets = [0, 128], sizes = [8, 64], strides = [1, 1]} : vector<8x256xf32> to vector<8x64xf32>
    %118 = vector.extract_strided_slice %114 {offsets = [0, 192], sizes = [8, 64], strides = [1, 1]} : vector<8x256xf32> to vector<8x64xf32>
    %119 = arith.mulf %116, %102 : vector<8x64xf32>
    %120 = arith.mulf %115, %118 : vector<8x64xf32>
    %121 = arith.addf %119, %120 : vector<8x64xf32>
    %122 = math.tanh %121 : vector<8x64xf32>
    %123 = arith.mulf %117, %122 : vector<8x64xf32>
    %c16_46 = arith.constant 16 : index
    %c0_47 = arith.constant 0 : index
    %124 = vector.load %arg12[%c16_46, %c0_47] : memref<64x64xf32, #tpu.memory_space<vmem>>, vector<8x64xf32>
    tpu.vector_store %arg12[%c16_46, %c0_47], %123 {strides = array<i32>} : memref<64x64xf32, #tpu.memory_space<vmem>>, vector<8x64xf32>,
    %c40_48 = arith.constant 40 : index
    %c0_49 = arith.constant 0 : index
    %125 = vector.load %arg13[%c40_48, %c0_49] : memref<64x64xf32, #tpu.memory_space<vmem>>, vector<8x64xf32>
    tpu.vector_store %arg13[%c40_48, %c0_49], %123 {strides = array<i32>} : memref<64x64xf32, #tpu.memory_space<vmem>>, vector<8x64xf32>,
    %c24_50 = arith.constant 24 : index
    %c0_51 = arith.constant 0 : index
    %126 = vector.load %arg11[%c24_50, %c0_51] : memref<64x256xf32, #tpu.memory_space<vmem>>, vector<8x256xf32>
    %127 = arith.truncf %123 : vector<8x64xf32> to vector<8x64xbf16>
    %cst_52 = arith.constant dense<0.000000e+00> : vector<8x256xf32>
    %128 = tpu.matmul %127, %70, %cst_52 {dimension_numbers = #tpu.dot_dimension_numbers<[1], [0], [0], [1], [0, 0, 1, 1], [], []>} : vector<8x64xbf16>, vector<64x256xbf16>, vector<8x256xf32> -> vector<8x256xf32>
    %129 = arith.addf %128, %126 : vector<8x256xf32>
    %130 = arith.mulf %129, %66 : vector<8x256xf32>
    %131 = math.tanh %130 : vector<8x256xf32>
    %132 = arith.mulf %131, %66 : vector<8x256xf32>
    %133 = arith.addf %132, %69 : vector<8x256xf32>
    %134 = vector.extract_strided_slice %133 {offsets = [0, 0], sizes = [8, 64], strides = [1, 1]} : vector<8x256xf32> to vector<8x64xf32>
    %135 = vector.extract_strided_slice %133 {offsets = [0, 64], sizes = [8, 64], strides = [1, 1]} : vector<8x256xf32> to vector<8x64xf32>
    %136 = vector.extract_strided_slice %133 {offsets = [0, 128], sizes = [8, 64], strides = [1, 1]} : vector<8x256xf32> to vector<8x64xf32>
    %137 = vector.extract_strided_slice %133 {offsets = [0, 192], sizes = [8, 64], strides = [1, 1]} : vector<8x256xf32> to vector<8x64xf32>
    %138 = arith.mulf %135, %121 : vector<8x64xf32>
    %139 = arith.mulf %134, %137 : vector<8x64xf32>
    %140 = arith.addf %138, %139 : vector<8x64xf32>
    %141 = math.tanh %140 : vector<8x64xf32>
    %142 = arith.mulf %136, %141 : vector<8x64xf32>
    %c24_53 = arith.constant 24 : index
    %c0_54 = arith.constant 0 : index
    %143 = vector.load %arg12[%c24_53, %c0_54] : memref<64x64xf32, #tpu.memory_space<vmem>>, vector<8x64xf32>
    tpu.vector_store %arg12[%c24_53, %c0_54], %142 {strides = array<i32>} : memref<64x64xf32, #tpu.memory_space<vmem>>, vector<8x64xf32>,
    %c32_55 = arith.constant 32 : index
    %c0_56 = arith.constant 0 : index
    %144 = vector.load %arg13[%c32_55, %c0_56] : memref<64x64xf32, #tpu.memory_space<vmem>>, vector<8x64xf32>
    tpu.vector_store %arg13[%c32_55, %c0_56], %142 {strides = array<i32>} : memref<64x64xf32, #tpu.memory_space<vmem>>, vector<8x64xf32>,
    %c32_57 = arith.constant 32 : index
    %c0_58 = arith.constant 0 : index
    %145 = vector.load %arg11[%c32_57, %c0_58] : memref<64x256xf32, #tpu.memory_space<vmem>>, vector<8x256xf32>
    %146 = arith.truncf %142 : vector<8x64xf32> to vector<8x64xbf16>
    %cst_59 = arith.constant dense<0.000000e+00> : vector<8x256xf32>
    %147 = tpu.matmul %146, %70, %cst_59 {dimension_numbers = #tpu.dot_dimension_numbers<[1], [0], [0], [1], [0, 0, 1, 1], [], []>} : vector<8x64xbf16>, vector<64x256xbf16>, vector<8x256xf32> -> vector<8x256xf32>
    %148 = arith.addf %147, %145 : vector<8x256xf32>
    %149 = arith.mulf %148, %66 : vector<8x256xf32>
    %150 = math.tanh %149 : vector<8x256xf32>
    %151 = arith.mulf %150, %66 : vector<8x256xf32>
    %152 = arith.addf %151, %69 : vector<8x256xf32>
    %153 = vector.extract_strided_slice %152 {offsets = [0, 0], sizes = [8, 64], strides = [1, 1]} : vector<8x256xf32> to vector<8x64xf32>
    %154 = vector.extract_strided_slice %152 {offsets = [0, 64], sizes = [8, 64], strides = [1, 1]} : vector<8x256xf32> to vector<8x64xf32>
    %155 = vector.extract_strided_slice %152 {offsets = [0, 128], sizes = [8, 64], strides = [1, 1]} : vector<8x256xf32> to vector<8x64xf32>
    %156 = vector.extract_strided_slice %152 {offsets = [0, 192], sizes = [8, 64], strides = [1, 1]} : vector<8x256xf32> to vector<8x64xf32>
    %157 = arith.mulf %154, %140 : vector<8x64xf32>
    %158 = arith.mulf %153, %156 : vector<8x64xf32>
    %159 = arith.addf %157, %158 : vector<8x64xf32>
    %160 = math.tanh %159 : vector<8x64xf32>
    %161 = arith.mulf %155, %160 : vector<8x64xf32>
    %c32_60 = arith.constant 32 : index
    %c0_61 = arith.constant 0 : index
    %162 = vector.load %arg12[%c32_60, %c0_61] : memref<64x64xf32, #tpu.memory_space<vmem>>, vector<8x64xf32>
    tpu.vector_store %arg12[%c32_60, %c0_61], %161 {strides = array<i32>} : memref<64x64xf32, #tpu.memory_space<vmem>>, vector<8x64xf32>,
    %c24_62 = arith.constant 24 : index
    %c0_63 = arith.constant 0 : index
    %163 = vector.load %arg13[%c24_62, %c0_63] : memref<64x64xf32, #tpu.memory_space<vmem>>, vector<8x64xf32>
    tpu.vector_store %arg13[%c24_62, %c0_63], %161 {strides = array<i32>} : memref<64x64xf32, #tpu.memory_space<vmem>>, vector<8x64xf32>,
    %c40_64 = arith.constant 40 : index
    %c0_65 = arith.constant 0 : index
    %164 = vector.load %arg11[%c40_64, %c0_65] : memref<64x256xf32, #tpu.memory_space<vmem>>, vector<8x256xf32>
    %165 = arith.truncf %161 : vector<8x64xf32> to vector<8x64xbf16>
    %cst_66 = arith.constant dense<0.000000e+00> : vector<8x256xf32>
    %166 = tpu.matmul %165, %70, %cst_66 {dimension_numbers = #tpu.dot_dimension_numbers<[1], [0], [0], [1], [0, 0, 1, 1], [], []>} : vector<8x64xbf16>, vector<64x256xbf16>, vector<8x256xf32> -> vector<8x256xf32>
    %167 = arith.addf %166, %164 : vector<8x256xf32>
    %168 = arith.mulf %167, %66 : vector<8x256xf32>
    %169 = math.tanh %168 : vector<8x256xf32>
    %170 = arith.mulf %169, %66 : vector<8x256xf32>
    %171 = arith.addf %170, %69 : vector<8x256xf32>
    %172 = vector.extract_strided_slice %171 {offsets = [0, 0], sizes = [8, 64], strides = [1, 1]} : vector<8x256xf32> to vector<8x64xf32>
    %173 = vector.extract_strided_slice %171 {offsets = [0, 64], sizes = [8, 64], strides = [1, 1]} : vector<8x256xf32> to vector<8x64xf32>
    %174 = vector.extract_strided_slice %171 {offsets = [0, 128], sizes = [8, 64], strides = [1, 1]} : vector<8x256xf32> to vector<8x64xf32>
    %175 = vector.extract_strided_slice %171 {offsets = [0, 192], sizes = [8, 64], strides = [1, 1]} : vector<8x256xf32> to vector<8x64xf32>
    %176 = arith.mulf %173, %159 : vector<8x64xf32>
    %177 = arith.mulf %172, %175 : vector<8x64xf32>
    %178 = arith.addf %176, %177 : vector<8x64xf32>
    %179 = math.tanh %178 : vector<8x64xf32>
    %180 = arith.mulf %174, %179 : vector<8x64xf32>
    %c40_67 = arith.constant 40 : index
    %c0_68 = arith.constant 0 : index
    %181 = vector.load %arg12[%c40_67, %c0_68] : memref<64x64xf32, #tpu.memory_space<vmem>>, vector<8x64xf32>
    tpu.vector_store %arg12[%c40_67, %c0_68], %180 {strides = array<i32>} : memref<64x64xf32, #tpu.memory_space<vmem>>, vector<8x64xf32>,
    %c16_69 = arith.constant 16 : index
    %c0_70 = arith.constant 0 : index
    %182 = vector.load %arg13[%c16_69, %c0_70] : memref<64x64xf32, #tpu.memory_space<vmem>>, vector<8x64xf32>
    tpu.vector_store %arg13[%c16_69, %c0_70], %180 {strides = array<i32>} : memref<64x64xf32, #tpu.memory_space<vmem>>, vector<8x64xf32>,
    %c48_71 = arith.constant 48 : index
    %c0_72 = arith.constant 0 : index
    %183 = vector.load %arg11[%c48_71, %c0_72] : memref<64x256xf32, #tpu.memory_space<vmem>>, vector<8x256xf32>
    %184 = arith.truncf %180 : vector<8x64xf32> to vector<8x64xbf16>
    %cst_73 = arith.constant dense<0.000000e+00> : vector<8x256xf32>
    %185 = tpu.matmul %184, %70, %cst_73 {dimension_numbers = #tpu.dot_dimension_numbers<[1], [0], [0], [1], [0, 0, 1, 1], [], []>} : vector<8x64xbf16>, vector<64x256xbf16>, vector<8x256xf32> -> vector<8x256xf32>
    %186 = arith.addf %185, %183 : vector<8x256xf32>
    %187 = arith.mulf %186, %66 : vector<8x256xf32>
    %188 = math.tanh %187 : vector<8x256xf32>
    %189 = arith.mulf %188, %66 : vector<8x256xf32>
    %190 = arith.addf %189, %69 : vector<8x256xf32>
    %191 = vector.extract_strided_slice %190 {offsets = [0, 0], sizes = [8, 64], strides = [1, 1]} : vector<8x256xf32> to vector<8x64xf32>
    %192 = vector.extract_strided_slice %190 {offsets = [0, 64], sizes = [8, 64], strides = [1, 1]} : vector<8x256xf32> to vector<8x64xf32>
    %193 = vector.extract_strided_slice %190 {offsets = [0, 128], sizes = [8, 64], strides = [1, 1]} : vector<8x256xf32> to vector<8x64xf32>
    %194 = vector.extract_strided_slice %190 {offsets = [0, 192], sizes = [8, 64], strides = [1, 1]} : vector<8x256xf32> to vector<8x64xf32>
    %195 = arith.mulf %192, %178 : vector<8x64xf32>
    %196 = arith.mulf %191, %194 : vector<8x64xf32>
    %197 = arith.addf %195, %196 : vector<8x64xf32>
    %198 = math.tanh %197 : vector<8x64xf32>
    %199 = arith.mulf %193, %198 : vector<8x64xf32>
    %c48_74 = arith.constant 48 : index
    %c0_75 = arith.constant 0 : index
    %200 = vector.load %arg12[%c48_74, %c0_75] : memref<64x64xf32, #tpu.memory_space<vmem>>, vector<8x64xf32>
    tpu.vector_store %arg12[%c48_74, %c0_75], %199 {strides = array<i32>} : memref<64x64xf32, #tpu.memory_space<vmem>>, vector<8x64xf32>,
    %c8_76 = arith.constant 8 : index
    %c0_77 = arith.constant 0 : index
    %201 = vector.load %arg13[%c8_76, %c0_77] : memref<64x64xf32, #tpu.memory_space<vmem>>, vector<8x64xf32>
    tpu.vector_store %arg13[%c8_76, %c0_77], %199 {strides = array<i32>} : memref<64x64xf32, #tpu.memory_space<vmem>>, vector<8x64xf32>,
    %c56_78 = arith.constant 56 : index
    %c0_79 = arith.constant 0 : index
    %202 = vector.load %arg11[%c56_78, %c0_79] : memref<64x256xf32, #tpu.memory_space<vmem>>, vector<8x256xf32>
    %203 = arith.truncf %199 : vector<8x64xf32> to vector<8x64xbf16>
    %cst_80 = arith.constant dense<0.000000e+00> : vector<8x256xf32>
    %204 = tpu.matmul %203, %70, %cst_80 {dimension_numbers = #tpu.dot_dimension_numbers<[1], [0], [0], [1], [0, 0, 1, 1], [], []>} : vector<8x64xbf16>, vector<64x256xbf16>, vector<8x256xf32> -> vector<8x256xf32>
    %205 = arith.addf %204, %202 : vector<8x256xf32>
    %206 = arith.mulf %205, %66 : vector<8x256xf32>
    %207 = math.tanh %206 : vector<8x256xf32>
    %208 = arith.mulf %207, %66 : vector<8x256xf32>
    %209 = arith.addf %208, %69 : vector<8x256xf32>
    %210 = vector.extract_strided_slice %209 {offsets = [0, 0], sizes = [8, 64], strides = [1, 1]} : vector<8x256xf32> to vector<8x64xf32>
    %211 = vector.extract_strided_slice %209 {offsets = [0, 64], sizes = [8, 64], strides = [1, 1]} : vector<8x256xf32> to vector<8x64xf32>
    %212 = vector.extract_strided_slice %209 {offsets = [0, 128], sizes = [8, 64], strides = [1, 1]} : vector<8x256xf32> to vector<8x64xf32>
    %213 = vector.extract_strided_slice %209 {offsets = [0, 192], sizes = [8, 64], strides = [1, 1]} : vector<8x256xf32> to vector<8x64xf32>
    %214 = arith.mulf %211, %197 : vector<8x64xf32>
    %215 = arith.mulf %210, %213 : vector<8x64xf32>
    %216 = arith.addf %214, %215 : vector<8x64xf32>
    %217 = math.tanh %216 : vector<8x64xf32>
    %218 = arith.mulf %212, %217 : vector<8x64xf32>
    %c56_81 = arith.constant 56 : index
    %c0_82 = arith.constant 0 : index
    %219 = vector.load %arg12[%c56_81, %c0_82] : memref<64x64xf32, #tpu.memory_space<vmem>>, vector<8x64xf32>
    tpu.vector_store %arg12[%c56_81, %c0_82], %218 {strides = array<i32>} : memref<64x64xf32, #tpu.memory_space<vmem>>, vector<8x64xf32>,
    %c0_83 = arith.constant 0 : index
    %c0_84 = arith.constant 0 : index
    %220 = vector.load %arg13[%c0_83, %c0_84] : memref<64x64xf32, #tpu.memory_space<vmem>>, vector<8x64xf32>
    tpu.vector_store %arg13[%c0_83, %c0_84], %218 {strides = array<i32>} : memref<64x64xf32, #tpu.memory_space<vmem>>, vector<8x64xf32>,
    %c0_85 = arith.constant 0 : index
    %c0_86 = arith.constant 0 : index
    %221 = vector.load %arg12[%c0_85, %c0_86] : memref<64x64xf32, #tpu.memory_space<vmem>>, vector<64x64xf32>
    %cst_87 = arith.constant 0.000000e+00 : f32
    %222 = vector.broadcast %cst_87 : f32 to vector<64x64xf32>
    %223 = arith.maximumf %221, %222 : vector<64x64xf32>
    %c0_88 = arith.constant 0 : index
    %c0_89 = arith.constant 0 : index
    %224 = vector.load %arg7[%c0_88, %c0_89] : memref<64x128xf32, #tpu.memory_space<vmem>>, vector<64x128xf32>
    %cst_90 = arith.constant dense<0.000000e+00> : vector<64x128xf32>
    %225 = tpu.matmul %223, %224, %cst_90 {dimension_numbers = #tpu.dot_dimension_numbers<[1], [0], [0], [1], [0, 0, 1, 1], [], []>} : vector<64x64xf32>, vector<64x128xf32>, vector<64x128xf32> -> vector<64x128xf32>
    %c0_91 = arith.constant 0 : index
    %c0_92 = arith.constant 0 : index
    %226 = vector.load %arg13[%c0_91, %c0_92] : memref<64x64xf32, #tpu.memory_space<vmem>>, vector<64x64xf32>
    %cst_93 = arith.constant 0.000000e+00 : f32
    %227 = vector.broadcast %cst_93 : f32 to vector<64x64xf32>
    %228 = arith.maximumf %226, %227 : vector<64x64xf32>
    %c0_94 = arith.constant 0 : index
    %c0_95 = arith.constant 0 : index
    %229 = vector.load %arg8[%c0_94, %c0_95] : memref<64x128xf32, #tpu.memory_space<vmem>>, vector<64x128xf32>
    %cst_96 = arith.constant dense<0.000000e+00> : vector<64x128xf32>
    %230 = tpu.matmul %228, %229, %cst_96 {dimension_numbers = #tpu.dot_dimension_numbers<[1], [0], [0], [1], [0, 0, 1, 1], [], []>} : vector<64x64xf32>, vector<64x128xf32>, vector<64x128xf32> -> vector<64x128xf32>
    %231 = arith.addf %225, %230 : vector<64x128xf32>
    %c0_97 = arith.constant 0 : index
    %c0_98 = arith.constant 0 : index
    %232 = vector.load %arg9[%c0_97, %c0_98] : memref<1x128xf32, #tpu.memory_space<vmem>>, vector<1x128xf32>
    %233 = vector.broadcast %232 : vector<1x128xf32> to vector<64x128xf32>
    %234 = arith.addf %231, %233 : vector<64x128xf32>
    %235 = tpu.iota {dimensions = array<i32: 1>} : vector<64x128xi32>
    %c4_i32 = arith.constant 4 : i32
    %236 = vector.broadcast %c4_i32 : i32 to vector<64x128xi32>
    %237 = arith.cmpi slt, %235, %236 : vector<64x128xi32>
    %c4_i32_99 = arith.constant 4 : i32
    %238 = vector.broadcast %c4_i32_99 : i32 to vector<64x128xi32>
    %239 = arith.cmpi sge, %235, %238 : vector<64x128xi32>
    %c9_i32 = arith.constant 9 : i32
    %240 = vector.broadcast %c9_i32 : i32 to vector<64x128xi32>
    %241 = arith.cmpi slt, %235, %240 : vector<64x128xi32>
    %242 = arith.andi %239, %241 : vector<64x128xi1>
    %cst_100 = arith.constant -1.000000e+30 : f32
    %243 = vector.broadcast %cst_100 : f32 to vector<64x128xf32>
    %244 = arith.select %242, %234, %243 : vector<64x128xi1>, vector<64x128xf32>
    %cst_101 = arith.constant dense<0xFF800000> : vector<64xf32>
    %245 = vector.multi_reduction <maximumf>, %244, %cst_101 [1] : vector<64x128xf32> to vector<64xf32>
    %246 = vector.shape_cast %245 : vector<64xf32> to vector<64x1xf32>
    %247 = vector.broadcast %246 : vector<64x1xf32> to vector<64x128xf32>
    %248 = arith.subf %244, %247 : vector<64x128xf32>
    %249 = math.exp %248 : vector<64x128xf32>
    %cst_102 = arith.constant dense<0.000000e+00> : vector<64xf32>
    %250 = vector.multi_reduction <add>, %249, %cst_102 [1] : vector<64x128xf32> to vector<64xf32>
    %251 = vector.shape_cast %250 : vector<64xf32> to vector<64x1xf32>
    %252 = tpu.reciprocal %251 {approx = true} : vector<64x1xf32> -> vector<64x1xf32>
    %253 = arith.mulf %251, %252 : vector<64x1xf32>
    %cst_103 = arith.constant 2.000000e+00 : f32
    %254 = vector.broadcast %cst_103 : f32 to vector<64x1xf32>
    %255 = arith.subf %254, %253 : vector<64x1xf32>
    %256 = arith.mulf %252, %255 : vector<64x1xf32>
    %257 = vector.broadcast %256 : vector<64x1xf32> to vector<64x128xf32>
    %258 = arith.mulf %249, %257 : vector<64x128xf32>
    %259 = math.tanh %234 : vector<64x128xf32>
    %260 = arith.select %242, %258, %234 : vector<64x128xi1>, vector<64x128xf32>
    %261 = arith.select %237, %259, %260 : vector<64x128xi1>, vector<64x128xf32>
    %c0_104 = arith.constant 0 : index
    %c0_105 = arith.constant 0 : index
    %262 = vector.load %arg10[%c0_104, %c0_105] : memref<64x128xf32, #tpu.memory_space<vmem>>, vector<64x128xf32>
    tpu.vector_store %arg10[%c0_104, %c0_105], %261 {strides = array<i32>} : memref<64x128xf32, #tpu.memory_space<vmem>>, vector<64x128xf32>,
    return
  }
}

</mosaic_0001>

<llo_original>
// kernel: actor_forward_pallas.1
$region0: #{actor_forward_pallas.1}
  #allocation0 [shape = 'u32[]', space=smem, size = 0x4, offset = 0x4, fixed_abs, tag = 'smem constant byte address 0x4 - core index']
  #allocation1 [shape = 'u32[72,128]{1,0:T(1,128)}', space=vmem, size = 0x9000, scoped, tag = 'internal scratch']
  #allocation2 [shape = 'f32[64,256]{1,0:T(8,128)}', space=vmem, size = 0x10000, scoped, tag = 'scratch operand']
  #allocation3 [shape = 'f32[64,64]{1,0:T(8,128)}', space=vmem, size = 0x8000, scoped, tag = 'scratch operand']
  #allocation4 [shape = 'f32[64,64]{1,0:T(8,128)}', space=vmem, size = 0x8000, scoped, tag = 'scratch operand']
  %s0 = inlined_call_operand.vmem [shape: f32[64,16], index: 0, kind: input, shape index: {}]
  %s1 = inlined_call_operand.vmem [shape: f32[16,64], index: 1, kind: input, shape index: {}]
  %s2 = inlined_call_operand.vmem [shape: f32[1,64], index: 2, kind: input, shape index: {}]
  %s3 = inlined_call_operand.hbm [shape: f32[64,256], index: 3, kind: input, shape index: {}]
  %s4 = inlined_call_operand.hbm [shape: f32[64,256], index: 4, kind: input, shape index: {}]
  %s5 = inlined_call_operand.vmem [shape: f32[1,256], index: 5, kind: input, shape index: {}]
  %s6 = inlined_call_operand.vmem [shape: bf16[64,256], index: 6, kind: input, shape index: {}]
  %s7 = inlined_call_operand.hbm [shape: f32[64,128], index: 7, kind: input, shape index: {}]
  %s8 = inlined_call_operand.hbm [shape: f32[64,128], index: 8, kind: input, shape index: {}]
  %s9 = inlined_call_operand.vmem [shape: f32[1,128], index: 9, kind: input, shape index: {}]
  %s10 = inlined_call_operand.vmem [shape: f32[64,128], index: 10, kind: output, shape index: {}]
  %s11 = sld [smem:[#allocation0]]
  $region66: #{actor_forward_pallas.1} parent=0
    _
  %s13 = ssub.s32 1, %s11
  %s14 = scalar_select 0, %s13, %s11
  $region1: #{actor_forward_pallas.1} parent=0
    #allocation5 [shape = 'u8[65536]{0}', space=vmem, size = 0x10000, scoped, tag = 'input window, operand 3, single buffered']
    #allocation6 [shape = 's32[1]{0}', space=sflag, size = 0x4, scoped, tag = 'scoped memory for actor_forward_pallas.1']
    #allocation7 [shape = 'u8[65536]{0}', space=vmem, size = 0x10000, scoped, tag = 'input window, operand 4, single buffered']
    #allocation8 [shape = 's32[1]{0}', space=sflag, size = 0x4, scoped, tag = 'scoped memory for actor_forward_pallas.1']
    #allocation9 [shape = 'u8[32768]{0}', space=vmem, size = 0x8000, scoped, tag = 'input window, operand 7, single buffered']
    #allocation10 [shape = 'u8[32768]{0}', space=vmem, size = 0x8000, scoped, tag = 'input window, operand 8, single buffered']
    #allocation11 [shape = 's32[1]{0}', space=sflag, size = 0x4, scoped, tag = 'scoped memory for actor_forward_pallas.1']
    %15 = vsyncpa [#allocation6], 0
    %16 = vsyncpa [#allocation8], 0
    %17 = vsyncpa [#allocation11], 0
    // Predicated region
    $region2: #{actor_forward_pallas.1} parent=1 // pred_check
      _
    $region3: #{actor_forward_pallas.1} parent=1 // pred_check_branch
      %19 = sbr.rel (0) target = $region5
    $region4: #{actor_forward_pallas.1} parent=1 // pred_region
      _
    $region5: #{actor_forward_pallas.1} parent=1 // pred_fallthru
      _
    // Predicated region
    $region6: #{actor_forward_pallas.1} parent=1 // pred_check
      _
    $region7: #{actor_forward_pallas.1} parent=1 // pred_check_branch
      %21 = sbr.rel (0) target = $region9
    $region8: #{actor_forward_pallas.1} parent=1 // pred_region
      _
    $region9: #{actor_forward_pallas.1} parent=1 // pred_fallthru
      _
    // Predicated region
    $region10: #{actor_forward_pallas.1} parent=1 // pred_check
      _
    $region11: #{actor_forward_pallas.1} parent=1 // pred_check_branch
      %23 = sbr.rel (0) target = $region13
    $region12: #{actor_forward_pallas.1} parent=1 // pred_region
      _
    $region13: #{actor_forward_pallas.1} parent=1 // pred_fallthru
      _
    // Predicated region
    $region14: #{actor_forward_pallas.1} parent=1 // pred_check
      _
    $region15: #{actor_forward_pallas.1} parent=1 // pred_check_branch
      %25 = sbr.rel (0) target = $region17
    $region16: #{actor_forward_pallas.1} parent=1 // pred_region
      %27 = vsyncadd [#allocation6], 0
      %s28 = sshll.u32 %s3, 4
      %s29 = int_to_ptr.hbm [resolvable:$true] %s28
      %s30 = sshll.u32 [#allocation5], 4
      %s31 = int_to_ptr.vmem [resolvable:$true] %s30
      %36 = dma.hbm_to_vmem [thread:$0]  %s29, 2048, %s31, [#allocation6], 256, 256, 16
    $region17: #{actor_forward_pallas.1} parent=1 // pred_fallthru
      _
    // Predicated region
    $region18: #{actor_forward_pallas.1} parent=1 // pred_check
      _
    $region19: #{actor_forward_pallas.1} parent=1 // pred_check_branch
      %38 = sbr.rel (0) target = $region21
    $region20: #{actor_forward_pallas.1} parent=1 // pred_region
      %40 = vsyncadd [#allocation8], 0
      %s41 = sshll.u32 %s4, 4
      %s42 = int_to_ptr.hbm [resolvable:$true] %s41
      %s43 = sshll.u32 [#allocation7], 4
      %s44 = int_to_ptr.vmem [resolvable:$true] %s43
      %49 = dma.hbm_to_vmem [thread:$0]  %s42, 2048, %s44, [#allocation8], 256, 256, 16
    $region21: #{actor_forward_pallas.1} parent=1 // pred_fallthru
      _
    // Predicated region
    $region22: #{actor_forward_pallas.1} parent=1 // pred_check
      _
    $region23: #{actor_forward_pallas.1} parent=1 // pred_check_branch
      %51 = sbr.rel (0) target = $region25
    $region24: #{actor_forward_pallas.1} parent=1 // pred_region
      _
    $region25: #{actor_forward_pallas.1} parent=1 // pred_fallthru
      _
    // Predicated region
    $region26: #{actor_forward_pallas.1} parent=1 // pred_check
      _
    $region27: #{actor_forward_pallas.1} parent=1 // pred_check_branch
      %53 = sbr.rel (0) target = $region29
    $region28: #{actor_forward_pallas.1} parent=1 // pred_region
      _
    $region29: #{actor_forward_pallas.1} parent=1 // pred_fallthru
      _
    // Predicated region
    $region30: #{actor_forward_pallas.1} parent=1 // pred_check
      _
    $region31: #{actor_forward_pallas.1} parent=1 // pred_check_branch
      %55 = sbr.rel (0) target = $region33
    $region32: #{actor_forward_pallas.1} parent=1 // pred_region
      %57 = vsyncadd [#allocation8], 0
      %s58 = sshll.u32 %s7, 4
      %s59 = int_to_ptr.hbm [resolvable:$true] %s58
      %s60 = sshll.u32 [#allocation9], 4
      %s61 = int_to_ptr.vmem [resolvable:$true] %s60
      %66 = dma.hbm_to_vmem [thread:$0]  %s59, 1024, %s61, [#allocation8], 128, 128, 8
    $region33: #{actor_forward_pallas.1} parent=1 // pred_fallthru
      _
    // Predicated region
    $region34: #{actor_forward_pallas.1} parent=1 // pred_check
      _
    $region35: #{actor_forward_pallas.1} parent=1 // pred_check_branch
      %68 = sbr.rel (0) target = $region37
    $region36: #{actor_forward_pallas.1} parent=1 // pred_region
      %70 = vsyncadd [#allocation11], 0
      %s71 = sshll.u32 %s8, 4
      %s72 = int_to_ptr.hbm [resolvable:$true] %s71
      %s73 = sshll.u32 [#allocation10], 4
      %s74 = int_to_ptr.vmem [resolvable:$true] %s73
      %79 = dma.hbm_to_vmem [thread:$0]  %s72, 1024, %s74, [#allocation11], 128, 128, 8
    $region37: #{actor_forward_pallas.1} parent=1 // pred_fallthru
      _
    // Predicated region
    $region38: #{actor_forward_pallas.1} parent=1 // pred_check
      _
    $region39: #{actor_forward_pallas.1} parent=1 // pred_check_branch
      %81 = sbr.rel (0) target = $region41
    $region40: #{actor_forward_pallas.1} parent=1 // pred_region
      _
    $region41: #{actor_forward_pallas.1} parent=1 // pred_fallthru
      _
    // Predicated region
    $region42: #{actor_forward_pallas.1} parent=1 // pred_check
      _
    $region43: #{actor_forward_pallas.1} parent=1 // pred_check_branch
      %83 = sbr.rel (0) target = $region45
    $region44: #{actor_forward_pallas.1} parent=1 // pred_region
      %85 = dma.done [#allocation6], 2048
    $region45: #{actor_forward_pallas.1} parent=1 // pred_fallthru
      _
    // Predicated region
    $region46: #{actor_forward_pallas.1} parent=1 // pred_check
      _
    $region47: #{actor_forward_pallas.1} parent=1 // pred_check_branch
      %87 = sbr.rel (0) target = $region49
    $region48: #{actor_forward_pallas.1} parent=1 // pred_region
      %89 = dma.done [#allocation8], 2048
    $region49: #{actor_forward_pallas.1} parent=1 // pred_fallthru
      _
    // Predicated region
    $region50: #{actor_forward_pallas.1} parent=1 // pred_check
      _
    $region51: #{actor_forward_pallas.1} parent=1 // pred_check_branch
      %91 = sbr.rel (0) target = $region53
    $region52: #{actor_forward_pallas.1} parent=1 // pred_region
      %93 = dma.done [#allocation8], 1024
    $region53: #{actor_forward_pallas.1} parent=1 // pred_fallthru
      _
    // Predicated region
    $region54: #{actor_forward_pallas.1} parent=1 // pred_check
      _
    $region55: #{actor_forward_pallas.1} parent=1 // pred_check_branch
      %95 = sbr.rel (0) target = $region57
    $region56: #{actor_forward_pallas.1} parent=1 // pred_region
      %97 = dma.done [#allocation11], 1024
    $region57: #{actor_forward_pallas.1} parent=1 // pred_fallthru
      _
    %v99 = vld [vmem:[%s0] sm:$0xff]
    %v100 = vld [vmem:[%s0 + $0x8] sm:$0xff]
    %v101 = vld [vmem:[%s0 + $0x10] sm:$0xff]
    %v102 = vld [vmem:[%s0 + $0x18] sm:$0xff]
    %v103 = vld [vmem:[%s0 + $0x20] sm:$0xff]
    %v104 = vld [vmem:[%s0 + $0x28] sm:$0xff]
    %v105 = vld [vmem:[%s0 + $0x30] sm:$0xff]
    %v106 = vld [vmem:[%s0 + $0x38] sm:$0xff]
    %v107 = vld [vmem:[%s1] sm:$0xff]
    %v108 = vld [vmem:[%s1 + $0x8] sm:$0xff]
    %v109 = vld [vmem:[%s2] sm:$0x1]
    %v111 = vperm.slane %v109, 0
    %vm113 = vcmask 130048
    %v115 = vsel %vm113, %v99, 0
    %v118 = vsel %vm113, %v100, 0
    %v121 = vsel %vm113, %v101, 0
    %v124 = vsel %vm113, %v102, 0
    %v127 = vsel %vm113, %v103, 0
    %v130 = vsel %vm113, %v104, 0
    %v133 = vsel %vm113, %v105, 0
    %v136 = vsel %vm113, %v106, 0
    %138 = vmatpush.msra.mxu0 0.0
    %139 = vmatpush.msra.mxu0 0.0
    %140 = vmatpush.msra.mxu0 0.0
    %141 = vmatpush.msra.mxu0 0.0
    %142 = vmatpush.msra.mxu0 0.0
    %143 = vmatpush.msra.mxu0 0.0
    %144 = vmatpush.msra.mxu0 0.0
    %145 = vmatpush.msra.mxu0 0.0
    %146 = vmatpush.msra.mxu0 0.0
    %147 = vmatpush.msra.mxu0 0.0
    %148 = vmatpush.msra.mxu0 0.0
    %149 = vmatpush.msra.mxu0 0.0
    %150 = vmatpush.msra.mxu0 0.0
    %151 = vmatpush.msra.mxu0 0.0
    %152 = vmatpush.msra.mxu0 %v108
    %153 = vmatpush.msra.mxu0 %v107
    %154 = vmatmul.f32.gmra.mxu0 %v115
    %v155 = vpop.f32.mrf.mxu0
    %v156 = vadd.f32 %v111, %v155
    %157 = vmatmul.f32.gmra.mxu0 %v118
    %v158 = vpop.f32.mrf.mxu0
    %v159 = vadd.f32 %v111, %v158
    %160 = vmatmul.f32.gmra.mxu0 %v121
    %v161 = vpop.f32.mrf.mxu0
    %v162 = vadd.f32 %v111, %v161
    %163 = vmatmul.f32.gmra.mxu0 %v124
    %v164 = vpop.f32.mrf.mxu0
    %v165 = vadd.f32 %v111, %v164
    %166 = vmatmul.f32.gmra.mxu0 %v127
    %v167 = vpop.f32.mrf.mxu0
    %v168 = vadd.f32 %v111, %v167
    %169 = vmatmul.f32.gmra.mxu0 %v130
    %v170 = vpop.f32.mrf.mxu0
    %v171 = vadd.f32 %v111, %v170
    %172 = vmatmul.f32.gmra.mxu0 %v133
    %v173 = vpop.f32.mrf.mxu0
    %v174 = vadd.f32 %v111, %v173
    %175 = vmatmul.f32.gmra.mxu0 %v136
    %v176 = vpop.f32.mrf.mxu0
    %v177 = vadd.f32 %v111, %v176
    %178 = vdwg.mxu0
    %v179 = vmax.f32 %v156, 0.0
    %v180 = vmax.f32 %v159, 0.0
    %v181 = vmax.f32 %v162, 0.0
    %v182 = vmax.f32 %v165, 0.0
    %v183 = vmax.f32 %v168, 0.0
    %v184 = vmax.f32 %v171, 0.0
    %v185 = vmax.f32 %v174, 0.0
    %v186 = vmax.f32 %v177, 0.0
    %v187 = vld [vmem:[#allocation5] sm:$0xff]
    %v188 = vld [vmem:[#allocation5 + $0x8] sm:$0xff]
    %v189 = vld [vmem:[#allocation5 + $0x10] sm:$0xff]
    %v190 = vld [vmem:[#allocation5 + $0x18] sm:$0xff]
    %v191 = vld [vmem:[#allocation5 + $0x20] sm:$0xff]
    %v192 = vld [vmem:[#allocation5 + $0x28] sm:$0xff]
    %v193 = vld [vmem:[#allocation5 + $0x30] sm:$0xff]
    %v194 = vld [vmem:[#allocation5 + $0x38] sm:$0xff]
    %v195 = vld [vmem:[#allocation5 + $0x40] sm:$0xff]
    %v196 = vld [vmem:[#allocation5 + $0x48] sm:$0xff]
    %v197 = vld [vmem:[#allocation5 + $0x50] sm:$0xff]
    %v198 = vld [vmem:[#allocation5 + $0x58] sm:$0xff]
    %v199 = vld [vmem:[#allocation5 + $0x60] sm:$0xff]
    %v200 = vld [vmem:[#allocation5 + $0x68] sm:$0xff]
    %v201 = vld [vmem:[#allocation5 + $0x70] sm:$0xff]
    %v202 = vld [vmem:[#allocation5 + $0x78] sm:$0xff]
    %vm203 = vcmask 523264
    %v205 = vsel %vm203, %v179, 0
    %v208 = vsel %vm203, %v180, 0
    %v211 = vsel %vm203, %v181, 0
    %v214 = vsel %vm203, %v182, 0
    %v217 = vsel %vm203, %v183, 0
    %v220 = vsel %vm203, %v184, 0
    %v223 = vsel %vm203, %v185, 0
    %v226 = vsel %vm203, %v186, 0
    %228 = vmatpush.msra.mxu0 0.0
    %229 = vmatpush.msra.mxu0 0.0
    %230 = vmatpush.msra.mxu0 0.0
    %231 = vmatpush.msra.mxu0 0.0
    %232 = vmatpush.msra.mxu0 0.0
    %233 = vmatpush.msra.mxu0 0.0
    %234 = vmatpush.msra.mxu0 0.0
    %235 = vmatpush.msra.mxu0 0.0
    %236 = vmatpush.msra.mxu0 %v201
    %237 = vmatpush.msra.mxu0 %v199
    %238 = vmatpush.msra.mxu0 %v197
    %239 = vmatpush.msra.mxu0 %v195
    %240 = vmatpush.msra.mxu0 %v193
    %241 = vmatpush.msra.mxu0 %v191
    %242 = vmatpush.msra.mxu0 %v189
    %243 = vmatpush.msra.mxu0 %v187
    %244 = vmatmul.f32.gmra.mxu0 %v205
    %v245 = vpop.f32.mrf.mxu0
    %v246 = vadd.f32 0.0, %v245
    %247 = vmatmul.f32.gmra.mxu0 %v208
    %v248 = vpop.f32.mrf.mxu0
    %v249 = vadd.f32 0.0, %v248
    %250 = vmatmul.f32.gmra.mxu0 %v211
    %v251 = vpop.f32.mrf.mxu0
    %v252 = vadd.f32 0.0, %v251
    %253 = vmatmul.f32.gmra.mxu0 %v214
    %v254 = vpop.f32.mrf.mxu0
    %v255 = vadd.f32 0.0, %v254
    %256 = vmatmul.f32.gmra.mxu0 %v217
    %v257 = vpop.f32.mrf.mxu0
    %v258 = vadd.f32 0.0, %v257
    %259 = vmatmul.f32.gmra.mxu0 %v220
    %v260 = vpop.f32.mrf.mxu0
    %v261 = vadd.f32 0.0, %v260
    %262 = vmatmul.f32.gmra.mxu0 %v223
    %v263 = vpop.f32.mrf.mxu0
    %v264 = vadd.f32 0.0, %v263
    %265 = vmatmul.f32.gmra.mxu0 %v226
    %v266 = vpop.f32.mrf.mxu0
    %v267 = vadd.f32 0.0, %v266
    %268 = vdwg.mxu0
    %269 = vmatpush.msra.mxu0 0.0
    %270 = vmatpush.msra.mxu0 0.0
    %271 = vmatpush.msra.mxu0 0.0
    %272 = vmatpush.msra.mxu0 0.0
    %273 = vmatpush.msra.mxu0 0.0
    %274 = vmatpush.msra.mxu0 0.0
    %275 = vmatpush.msra.mxu0 0.0
    %276 = vmatpush.msra.mxu0 0.0
    %277 = vmatpush.msra.mxu0 %v202
    %278 = vmatpush.msra.mxu0 %v200
    %279 = vmatpush.msra.mxu0 %v198
    %280 = vmatpush.msra.mxu0 %v196
    %281 = vmatpush.msra.mxu0 %v194
    %282 = vmatpush.msra.mxu0 %v192
    %283 = vmatpush.msra.mxu0 %v190
    %284 = vmatpush.msra.mxu0 %v188
    %285 = vmatmul.f32.gmra.mxu0 %v205
    %v286 = vpop.f32.mrf.mxu0
    %v287 = vadd.f32 0.0, %v286
    %288 = vmatmul.f32.gmra.mxu0 %v208
    %v289 = vpop.f32.mrf.mxu0
    %v290 = vadd.f32 0.0, %v289
    %291 = vmatmul.f32.gmra.mxu0 %v211
    %v292 = vpop.f32.mrf.mxu0
    %v293 = vadd.f32 0.0, %v292
    %294 = vmatmul.f32.gmra.mxu0 %v214
    %v295 = vpop.f32.mrf.mxu0
    %v296 = vadd.f32 0.0, %v295
    %297 = vmatmul.f32.gmra.mxu0 %v217
    %v298 = vpop.f32.mrf.mxu0
    %v299 = vadd.f32 0.0, %v298
    %300 = vmatmul.f32.gmra.mxu0 %v220
    %v301 = vpop.f32.mrf.mxu0
    %v302 = vadd.f32 0.0, %v301
    %303 = vmatmul.f32.gmra.mxu0 %v223
    %v304 = vpop.f32.mrf.mxu0
    %v305 = vadd.f32 0.0, %v304
    %306 = vmatmul.f32.gmra.mxu0 %v226
    %v307 = vpop.f32.mrf.mxu0
    %v308 = vadd.f32 0.0, %v307
    %309 = vdwg.mxu0
    %v310 = vld [vmem:[#allocation7] sm:$0xff]
    %v311 = vld [vmem:[#allocation7 + $0x8] sm:$0xff]
    %v312 = vld [vmem:[#allocation7 + $0x10] sm:$0xff]
    %v313 = vld [vmem:[#allocation7 + $0x18] sm:$0xff]
    %v314 = vld [vmem:[#allocation7 + $0x20] sm:$0xff]
    %v315 = vld [vmem:[#allocation7 + $0x28] sm:$0xff]
    %v316 = vld [vmem:[#allocation7 + $0x30] sm:$0xff]
    %v317 = vld [vmem:[#allocation7 + $0x38] sm:$0xff]
    %v318 = vld [vmem:[#allocation7 + $0x40] sm:$0xff]
    %v319 = vld [vmem:[#allocation7 + $0x48] sm:$0xff]
    %v320 = vld [vmem:[#allocation7 + $0x50] sm:$0xff]
    %v321 = vld [vmem:[#allocation7 + $0x58] sm:$0xff]
    %v322 = vld [vmem:[#allocation7 + $0x60] sm:$0xff]
    %v323 = vld [vmem:[#allocation7 + $0x68] sm:$0xff]
    %v324 = vld [vmem:[#allocation7 + $0x70] sm:$0xff]
    %v325 = vld [vmem:[#allocation7 + $0x78] sm:$0xff]
    %326 = vmatpush.msra.mxu0 0.0
    %327 = vmatpush.msra.mxu0 0.0
    %328 = vmatpush.msra.mxu0 0.0
    %329 = vmatpush.msra.mxu0 0.0
    %330 = vmatpush.msra.mxu0 0.0
    %331 = vmatpush.msra.mxu0 0.0
    %332 = vmatpush.msra.mxu0 0.0
    %333 = vmatpush.msra.mxu0 0.0
    %334 = vmatpush.msra.mxu0 %v324
    %335 = vmatpush.msra.mxu0 %v322
    %336 = vmatpush.msra.mxu0 %v320
    %337 = vmatpush.msra.mxu0 %v318
    %338 = vmatpush.msra.mxu0 %v316
    %339 = vmatpush.msra.mxu0 %v314
    %340 = vmatpush.msra.mxu0 %v312
    %341 = vmatpush.msra.mxu0 %v310
    %342 = vmatmul.f32.gmra.mxu0 %v205
    %v343 = vpop.f32.mrf.mxu0
    %v344 = vadd.f32 0.0, %v343
    %345 = vmatmul.f32.gmra.mxu0 %v208
    %v346 = vpop.f32.mrf.mxu0
    %v347 = vadd.f32 0.0, %v346
    %348 = vmatmul.f32.gmra.mxu0 %v211
    %v349 = vpop.f32.mrf.mxu0
    %v350 = vadd.f32 0.0, %v349
    %351 = vmatmul.f32.gmra.mxu0 %v214
    %v352 = vpop.f32.mrf.mxu0
    %v353 = vadd.f32 0.0, %v352
    %354 = vmatmul.f32.gmra.mxu0 %v217
    %v355 = vpop.f32.mrf.mxu0
    %v356 = vadd.f32 0.0, %v355
    %357 = vmatmul.f32.gmra.mxu0 %v220
    %v358 = vpop.f32.mrf.mxu0
    %v359 = vadd.f32 0.0, %v358
    %360 = vmatmul.f32.gmra.mxu0 %v223
    %v361 = vpop.f32.mrf.mxu0
    %v362 = vadd.f32 0.0, %v361
    %363 = vmatmul.f32.gmra.mxu0 %v226
    %v364 = vpop.f32.mrf.mxu0
    %v365 = vadd.f32 0.0, %v364
    %366 = vdwg.mxu0
    %367 = vmatpush.msra.mxu0 0.0
    %368 = vmatpush.msra.mxu0 0.0
    %369 = vmatpush.msra.mxu0 0.0
    %370 = vmatpush.msra.mxu0 0.0
    %371 = vmatpush.msra.mxu0 0.0
    %372 = vmatpush.msra.mxu0 0.0
    %373 = vmatpush.msra.mxu0 0.0
    %374 = vmatpush.msra.mxu0 0.0
    %375 = vmatpush.msra.mxu0 %v325
    %376 = vmatpush.msra.mxu0 %v323
    %377 = vmatpush.msra.mxu0 %v321
    %378 = vmatpush.msra.mxu0 %v319
    %379 = vmatpush.msra.mxu0 %v317
    %380 = vmatpush.msra.mxu0 %v315
    %381 = vmatpush.msra.mxu0 %v313
    %382 = vmatpush.msra.mxu0 %v311
    %383 = vmatmul.f32.gmra.mxu0 %v205
    %v384 = vpop.f32.mrf.mxu0
    %v385 = vadd.f32 0.0, %v384
    %386 = vmatmul.f32.gmra.mxu0 %v208
    %v387 = vpop.f32.mrf.mxu0
    %v388 = vadd.f32 0.0, %v387
    %389 = vmatmul.f32.gmra.mxu0 %v211
    %v390 = vpop.f32.mrf.mxu0
    %v391 = vadd.f32 0.0, %v390
    %392 = vmatmul.f32.gmra.mxu0 %v214
    %v393 = vpop.f32.mrf.mxu0
    %v394 = vadd.f32 0.0, %v393
    %395 = vmatmul.f32.gmra.mxu0 %v217
    %v396 = vpop.f32.mrf.mxu0
    %v397 = vadd.f32 0.0, %v396
    %398 = vmatmul.f32.gmra.mxu0 %v220
    %v399 = vpop.f32.mrf.mxu0
    %v400 = vadd.f32 0.0, %v399
    %401 = vmatmul.f32.gmra.mxu0 %v223
    %v402 = vpop.f32.mrf.mxu0
    %v403 = vadd.f32 0.0, %v402
    %404 = vmatmul.f32.gmra.mxu0 %v226
    %v405 = vpop.f32.mrf.mxu0
    %v406 = vadd.f32 0.0, %v405
    %407 = vdwg.mxu0
    %v408 = vld [vmem:[%s5] sm:$0x3]
    %v409 = vadd.f32 %v246, %v365
    %v410 = vadd.f32 %v287, %v406
    %v412 = vperm.slane %v408, 0
    %v413 = vperm.slane %v408, 1
    %v416 = vadd.f32 %v409, %v412
    %v417 = vadd.f32 %v410, %v413
    %418 = vst [vmem:[#allocation2] sm:$0xff] %v416
    %419 = vst [vmem:[#allocation2 + $0x8] sm:$0xff] %v417
    %v420 = vadd.f32 %v249, %v362
    %v421 = vadd.f32 %v290, %v403
    %v422 = vadd.f32 %v420, %v412
    %v423 = vadd.f32 %v421, %v413
    %424 = vst [vmem:[#allocation2 + $0x10] sm:$0xff] %v422
    %425 = vst [vmem:[#allocation2 + $0x18] sm:$0xff] %v423
    %v426 = vadd.f32 %v252, %v359
    %v427 = vadd.f32 %v293, %v400
    %v428 = vadd.f32 %v426, %v412
    %v429 = vadd.f32 %v427, %v413
    %430 = vst [vmem:[#allocation2 + $0x20] sm:$0xff] %v428
    %431 = vst [vmem:[#allocation2 + $0x28] sm:$0xff] %v429
    %v432 = vadd.f32 %v255, %v356
    %v433 = vadd.f32 %v296, %v397
    %v434 = vadd.f32 %v432, %v412
    %v435 = vadd.f32 %v433, %v413
    %436 = vst [vmem:[#allocation2 + $0x30] sm:$0xff] %v434
    %437 = vst [vmem:[#allocation2 + $0x38] sm:$0xff] %v435
    %v438 = vadd.f32 %v258, %v353
    %v439 = vadd.f32 %v299, %v394
    %v440 = vadd.f32 %v438, %v412
    %v441 = vadd.f32 %v439, %v413
    %442 = vst [vmem:[#allocation2 + $0x40] sm:$0xff] %v440
    %443 = vst [vmem:[#allocation2 + $0x48] sm:$0xff] %v441
    %v444 = vadd.f32 %v261, %v350
    %v445 = vadd.f32 %v302, %v391
    %v446 = vadd.f32 %v444, %v412
    %v447 = vadd.f32 %v445, %v413
    %448 = vst [vmem:[#allocation2 + $0x50] sm:$0xff] %v446
    %449 = vst [vmem:[#allocation2 + $0x58] sm:$0xff] %v447
    %v450 = vadd.f32 %v264, %v347
    %v451 = vadd.f32 %v305, %v388
    %v452 = vadd.f32 %v450, %v412
    %v453 = vadd.f32 %v451, %v413
    %454 = vst [vmem:[#allocation2 + $0x60] sm:$0xff] %v452
    %455 = vst [vmem:[#allocation2 + $0x68] sm:$0xff] %v453
    %v456 = vadd.f32 %v267, %v344
    %v457 = vadd.f32 %v308, %v385
    %v458 = vadd.f32 %v456, %v412
    %v459 = vadd.f32 %v457, %v413
    %460 = vst [vmem:[#allocation2 + $0x70] sm:$0xff] %v458
    %461 = vst [vmem:[#allocation2 + $0x78] sm:$0xff] %v459
    %v462 = vlaneseq
    %v463 = vand.u32 %v462, 127
    %v464 = vadd.s32 %v463, 128
    %vm465 = vcmp.lt.s32.totalorder %v463, 192
    %vm466 = vcmp.lt.s32.totalorder %v464, 192
    %v467 = vsel %vm465, 0.5, 1.0
    %v468 = vsel %vm466, 0.5, 1.0
    %v469 = vsel %vm465, 0.5, 0.0
    %v470 = vsel %vm466, 0.5, 0.0
    %v471 = vld [vmem:[%s6] sm:$0xff]
    %v472 = vld [vmem:[%s6 + $0x8] sm:$0xff]
    %v473 = vld [vmem:[%s6 + $0x10] sm:$0xff]
    %v474 = vld [vmem:[%s6 + $0x18] sm:$0xff]
    %v475 = vld [vmem:[%s6 + $0x20] sm:$0xff]
    %v476 = vld [vmem:[%s6 + $0x28] sm:$0xff]
    %v477 = vld [vmem:[%s6 + $0x30] sm:$0xff]
    %v478 = vld [vmem:[%s6 + $0x38] sm:$0xff]
    %v479 = vld [vmem:[#allocation2] sm:$0xff]
    %v480 = vld [vmem:[#allocation2 + $0x8] sm:$0xff]
    %v481 = vmul.f32 %v479, %v467
    %v482 = vmul.f32 %v480, %v468
    %v483 = vtanh.pop %v481
    %v484 = vtanh.pop %v482
    %v485 = vmul.f32 %v483, %v467
    %v486 = vmul.f32 %v484, %v468
    %v487 = vadd.f32 %v485, %v469
    %v488 = vadd.f32 %v486, %v470
    %v489 = vmul.f32 %v487, 0.0
    %491 = vrot.lane.b32.xlu0 %v488, 64
    %v492 = vpop.permute.xlu0 %491
    %v494 = vmul.f32 %v487, %v492
    %496 = vrot.lane.b32.xlu0 %v494, 64
    %v497 = vpop.permute.xlu0 %496
    %v499 = vadd.f32 %v489, %v497
    %v500 = vtanh.pop %v499
    %502 = vrot.lane.b32.xlu0 %v500, 64
    %v503 = vpop.permute.xlu0 %502
    %v505 = vmul.f32 %v488, %v503
    %506 = vst.msk [vmem:[#allocation3] sm:$0xff] %vm203, %v505
    %507 = vst.msk [vmem:[#allocation4 + $0x38] sm:$0xff] %vm203, %v505
    %v508 = vld [vmem:[#allocation2 + $0x10] sm:$0xff]
    %v509 = vld [vmem:[#allocation2 + $0x18] sm:$0xff]
    %v510 = vpack.c.bf16 %v505, %v505
    %v519 = vunpack.c.l.b16 %v471
    %v520 = vunpack.c.h.b16 %v471
    %v521 = vunpack.c.l.b16 %v472
    %v522 = vunpack.c.h.b16 %v472
    %v523 = vunpack.c.l.b16 %v473
    %v524 = vunpack.c.h.b16 %v473
    %v525 = vunpack.c.l.b16 %v474
    %v526 = vunpack.c.h.b16 %v474
    %v527 = vunpack.c.l.b16 %v475
    %v528 = vunpack.c.h.b16 %v475
    %v529 = vunpack.c.l.b16 %v476
    %v530 = vunpack.c.h.b16 %v476
    %v531 = vunpack.c.l.b16 %v477
    %v532 = vunpack.c.h.b16 %v477
    %v533 = vunpack.c.l.b16 %v478
    %v534 = vunpack.c.h.b16 %v478
    %v535 = vpack.c.b16 %v521, %v519
    %v536 = vpack.c.b16 %v522, %v520
    %v537 = vpack.c.b16 %v525, %v523
    %v538 = vpack.c.b16 %v526, %v524
    %v539 = vpack.c.b16 %v529, %v527
    %v540 = vpack.c.b16 %v530, %v528
    %v541 = vpack.c.b16 %v533, %v531
    %v542 = vpack.c.b16 %v534, %v532
    %v552 = vsel %vm203, %v510, 0
    %554 = vmatpush.bf16.msra.mxu0 0
    %555 = vmatpush.bf16.msra.mxu0 0
    %556 = vmatpush.bf16.msra.mxu0 0
    %557 = vmatpush.bf16.msra.mxu0 0
    %558 = vmatpush.bf16.msra.mxu0 %v541
    %559 = vmatpush.bf16.msra.mxu0 %v539
    %560 = vmatpush.bf16.msra.mxu0 %v537
    %561 = vmatpush.bf16.msra.mxu0 %v535
    %562 = vmatmul.bf16.gmra.mxu0 %v552
    %v563 = vpop.f32.mrf.mxu0
    %v564 = vadd.f32 %v508, %v563
    %v565 = vpop.f32.mrf.mxu0
    %566 = vdwg.mxu0
    %567 = vmatpush.bf16.msra.mxu0 0
    %568 = vmatpush.bf16.msra.mxu0 0
    %569 = vmatpush.bf16.msra.mxu0 0
    %570 = vmatpush.bf16.msra.mxu0 0
    %571 = vmatpush.bf16.msra.mxu0 %v542
    %572 = vmatpush.bf16.msra.mxu0 %v540
    %573 = vmatpush.bf16.msra.mxu0 %v538
    %574 = vmatpush.bf16.msra.mxu0 %v536
    %575 = vmatmul.bf16.gmra.mxu0 %v552
    %v576 = vpop.f32.mrf.mxu0
    %v577 = vadd.f32 %v509, %v576
    %v578 = vpop.f32.mrf.mxu0
    %579 = vdwg.mxu0
    %v580 = vmul.f32 %v564, %v467
    %v581 = vmul.f32 %v577, %v468
    %v582 = vtanh.pop %v580
    %v583 = vtanh.pop %v581
    %v584 = vmul.f32 %v582, %v467
    %v585 = vmul.f32 %v583, %v468
    %v586 = vadd.f32 %v584, %v469
    %v587 = vadd.f32 %v585, %v470
    %v588 = vmul.f32 %v586, %v499
    %590 = vrot.lane.b32.xlu0 %v587, 64
    %v591 = vpop.permute.xlu0 %590
    %v593 = vmul.f32 %v586, %v591
    %595 = vrot.lane.b32.xlu0 %v593, 64
    %v596 = vpop.permute.xlu0 %595
    %v598 = vadd.f32 %v588, %v596
    %v599 = vtanh.pop %v598
    %601 = vrot.lane.b32.xlu0 %v599, 64
    %v602 = vpop.permute.xlu0 %601
    %v604 = vmul.f32 %v587, %v602
    %605 = vst.msk [vmem:[#allocation3 + $0x8] sm:$0xff] %vm203, %v604
    %606 = vst.msk [vmem:[#allocation4 + $0x30] sm:$0xff] %vm203, %v604
    %v607 = vld [vmem:[#allocation2 + $0x20] sm:$0xff]
    %v608 = vld [vmem:[#allocation2 + $0x28] sm:$0xff]
    %v609 = vpack.c.bf16 %v604, %v604
    %v611 = vsel %vm203, %v609, 0
    %613 = vmatpush.bf16.msra.mxu0 0
    %614 = vmatpush.bf16.msra.mxu0 0
    %615 = vmatpush.bf16.msra.mxu0 0
    %616 = vmatpush.bf16.msra.mxu0 0
    %617 = vmatpush.bf16.msra.mxu0 %v541
    %618 = vmatpush.bf16.msra.mxu0 %v539
    %619 = vmatpush.bf16.msra.mxu0 %v537
    %620 = vmatpush.bf16.msra.mxu0 %v535
    %621 = vmatmul.bf16.gmra.mxu0 %v611
    %v622 = vpop.f32.mrf.mxu0
    %v623 = vadd.f32 %v607, %v622
    %v624 = vpop.f32.mrf.mxu0
    %625 = vdwg.mxu0
    %626 = vmatpush.bf16.msra.mxu0 0
    %627 = vmatpush.bf16.msra.mxu0 0
    %628 = vmatpush.bf16.msra.mxu0 0
    %629 = vmatpush.bf16.msra.mxu0 0
    %630 = vmatpush.bf16.msra.mxu0 %v542
    %631 = vmatpush.bf16.msra.mxu0 %v540
    %632 = vmatpush.bf16.msra.mxu0 %v538
    %633 = vmatpush.bf16.msra.mxu0 %v536
    %634 = vmatmul.bf16.gmra.mxu0 %v611
    %v635 = vpop.f32.mrf.mxu0
    %v636 = vadd.f32 %v608, %v635
    %v637 = vpop.f32.mrf.mxu0
    %638 = vdwg.mxu0
    %v639 = vmul.f32 %v623, %v467
    %v640 = vmul.f32 %v636, %v468
    %v641 = vtanh.pop %v639
    %v642 = vtanh.pop %v640
    %v643 = vmul.f32 %v641, %v467
    %v644 = vmul.f32 %v642, %v468
    %v645 = vadd.f32 %v643, %v469
    %v646 = vadd.f32 %v644, %v470
    %v647 = vmul.f32 %v645, %v598
    %649 = vrot.lane.b32.xlu0 %v646, 64
    %v650 = vpop.permute.xlu0 %649
    %v652 = vmul.f32 %v645, %v650
    %654 = vrot.lane.b32.xlu0 %v652, 64
    %v655 = vpop.permute.xlu0 %654
    %v657 = vadd.f32 %v647, %v655
    %v658 = vtanh.pop %v657
    %660 = vrot.lane.b32.xlu0 %v658, 64
    %v661 = vpop.permute.xlu0 %660
    %v663 = vmul.f32 %v646, %v661
    %664 = vst.msk [vmem:[#allocation3 + $0x10] sm:$0xff] %vm203, %v663
    %665 = vst.msk [vmem:[#allocation4 + $0x28] sm:$0xff] %vm203, %v663
    %v666 = vld [vmem:[#allocation2 + $0x30] sm:$0xff]
    %v667 = vld [vmem:[#allocation2 + $0x38] sm:$0xff]
    %v668 = vpack.c.bf16 %v663, %v663
    %v670 = vsel %vm203, %v668, 0
    %672 = vmatpush.bf16.msra.mxu0 0
    %673 = vmatpush.bf16.msra.mxu0 0
    %674 = vmatpush.bf16.msra.mxu0 0
    %675 = vmatpush.bf16.msra.mxu0 0
    %676 = vmatpush.bf16.msra.mxu0 %v541
    %677 = vmatpush.bf16.msra.mxu0 %v539
    %678 = vmatpush.bf16.msra.mxu0 %v537
    %679 = vmatpush.bf16.msra.mxu0 %v535
    %680 = vmatmul.bf16.gmra.mxu0 %v670
    %v681 = vpop.f32.mrf.mxu0
    %v682 = vadd.f32 %v666, %v681
    %v683 = vpop.f32.mrf.mxu0
    %684 = vdwg.mxu0
    %685 = vmatpush.bf16.msra.mxu0 0
    %686 = vmatpush.bf16.msra.mxu0 0
    %687 = vmatpush.bf16.msra.mxu0 0
    %688 = vmatpush.bf16.msra.mxu0 0
    %689 = vmatpush.bf16.msra.mxu0 %v542
    %690 = vmatpush.bf16.msra.mxu0 %v540
    %691 = vmatpush.bf16.msra.mxu0 %v538
    %692 = vmatpush.bf16.msra.mxu0 %v536
    %693 = vmatmul.bf16.gmra.mxu0 %v670
    %v694 = vpop.f32.mrf.mxu0
    %v695 = vadd.f32 %v667, %v694
    %v696 = vpop.f32.mrf.mxu0
    %697 = vdwg.mxu0
    %v698 = vmul.f32 %v682, %v467
    %v699 = vmul.f32 %v695, %v468
    %v700 = vtanh.pop %v698
    %v701 = vtanh.pop %v699
    %v702 = vmul.f32 %v700, %v467
    %v703 = vmul.f32 %v701, %v468
    %v704 = vadd.f32 %v702, %v469
    %v705 = vadd.f32 %v703, %v470
    %v706 = vmul.f32 %v704, %v657
    %708 = vrot.lane.b32.xlu0 %v705, 64
    %v709 = vpop.permute.xlu0 %708
    %v711 = vmul.f32 %v704, %v709
    %713 = vrot.lane.b32.xlu0 %v711, 64
    %v714 = vpop.permute.xlu0 %713
    %v716 = vadd.f32 %v706, %v714
    %v717 = vtanh.pop %v716
    %719 = vrot.lane.b32.xlu0 %v717, 64
    %v720 = vpop.permute.xlu0 %719
    %v722 = vmul.f32 %v705, %v720
    %723 = vst.msk [vmem:[#allocation3 + $0x18] sm:$0xff] %vm203, %v722
    %724 = vst.msk [vmem:[#allocation4 + $0x20] sm:$0xff] %vm203, %v722
    %v725 = vld [vmem:[#allocation2 + $0x40] sm:$0xff]
    %v726 = vld [vmem:[#allocation2 + $0x48] sm:$0xff]
    %v727 = vpack.c.bf16 %v722, %v722
    %v729 = vsel %vm203, %v727, 0
    %731 = vmatpush.bf16.msra.mxu0 0
    %732 = vmatpush.bf16.msra.mxu0 0
    %733 = vmatpush.bf16.msra.mxu0 0
    %734 = vmatpush.bf16.msra.mxu0 0
    %735 = vmatpush.bf16.msra.mxu0 %v541
    %736 = vmatpush.bf16.msra.mxu0 %v539
    %737 = vmatpush.bf16.msra.mxu0 %v537
    %738 = vmatpush.bf16.msra.mxu0 %v535
    %739 = vmatmul.bf16.gmra.mxu0 %v729
    %v740 = vpop.f32.mrf.mxu0
    %v741 = vadd.f32 %v725, %v740
    %v742 = vpop.f32.mrf.mxu0
    %743 = vdwg.mxu0
    %744 = vmatpush.bf16.msra.mxu0 0
    %745 = vmatpush.bf16.msra.mxu0 0
    %746 = vmatpush.bf16.msra.mxu0 0
    %747 = vmatpush.bf16.msra.mxu0 0
    %748 = vmatpush.bf16.msra.mxu0 %v542
    %749 = vmatpush.bf16.msra.mxu0 %v540
    %750 = vmatpush.bf16.msra.mxu0 %v538
    %751 = vmatpush.bf16.msra.mxu0 %v536
    %752 = vmatmul.bf16.gmra.mxu0 %v729
    %v753 = vpop.f32.mrf.mxu0
    %v754 = vadd.f32 %v726, %v753
    %v755 = vpop.f32.mrf.mxu0
    %756 = vdwg.mxu0
    %v757 = vmul.f32 %v741, %v467
    %v758 = vmul.f32 %v754, %v468
    %v759 = vtanh.pop %v757
    %v760 = vtanh.pop %v758
    %v761 = vmul.f32 %v759, %v467
    %v762 = vmul.f32 %v760, %v468
    %v763 = vadd.f32 %v761, %v469
    %v764 = vadd.f32 %v762, %v470
    %v765 = vmul.f32 %v763, %v716
    %767 = vrot.lane.b32.xlu0 %v764, 64
    %v768 = vpop.permute.xlu0 %767
    %v770 = vmul.f32 %v763, %v768
    %772 = vrot.lane.b32.xlu0 %v770, 64
    %v773 = vpop.permute.xlu0 %772
    %v775 = vadd.f32 %v765, %v773
    %v776 = vtanh.pop %v775
    %778 = vrot.lane.b32.xlu0 %v776, 64
    %v779 = vpop.permute.xlu0 %778
    %v781 = vmul.f32 %v764, %v779
    %782 = vst.msk [vmem:[#allocation3 + $0x20] sm:$0xff] %vm203, %v781
    %783 = vst.msk [vmem:[#allocation4 + $0x18] sm:$0xff] %vm203, %v781
    %v784 = vld [vmem:[#allocation2 + $0x50] sm:$0xff]
    %v785 = vld [vmem:[#allocation2 + $0x58] sm:$0xff]
    %v786 = vpack.c.bf16 %v781, %v781
    %v788 = vsel %vm203, %v786, 0
    %790 = vmatpush.bf16.msra.mxu0 0
    %791 = vmatpush.bf16.msra.mxu0 0
    %792 = vmatpush.bf16.msra.mxu0 0
    %793 = vmatpush.bf16.msra.mxu0 0
    %794 = vmatpush.bf16.msra.mxu0 %v541
    %795 = vmatpush.bf16.msra.mxu0 %v539
    %796 = vmatpush.bf16.msra.mxu0 %v537
    %797 = vmatpush.bf16.msra.mxu0 %v535
    %798 = vmatmul.bf16.gmra.mxu0 %v788
    %v799 = vpop.f32.mrf.mxu0
    %v800 = vadd.f32 %v784, %v799
    %v801 = vpop.f32.mrf.mxu0
    %802 = vdwg.mxu0
    %803 = vmatpush.bf16.msra.mxu0 0
    %804 = vmatpush.bf16.msra.mxu0 0
    %805 = vmatpush.bf16.msra.mxu0 0
    %806 = vmatpush.bf16.msra.mxu0 0
    %807 = vmatpush.bf16.msra.mxu0 %v542
    %808 = vmatpush.bf16.msra.mxu0 %v540
    %809 = vmatpush.bf16.msra.mxu0 %v538
    %810 = vmatpush.bf16.msra.mxu0 %v536
    %811 = vmatmul.bf16.gmra.mxu0 %v788
    %v812 = vpop.f32.mrf.mxu0
    %v813 = vadd.f32 %v785, %v812
    %v814 = vpop.f32.mrf.mxu0
    %815 = vdwg.mxu0
    %v816 = vmul.f32 %v800, %v467
    %v817 = vmul.f32 %v813, %v468
    %v818 = vtanh.pop %v816
    %v819 = vtanh.pop %v817
    %v820 = vmul.f32 %v818, %v467
    %v821 = vmul.f32 %v819, %v468
    %v822 = vadd.f32 %v820, %v469
    %v823 = vadd.f32 %v821, %v470
    %v824 = vmul.f32 %v822, %v775
    %826 = vrot.lane.b32.xlu0 %v823, 64
    %v827 = vpop.permute.xlu0 %826
    %v829 = vmul.f32 %v822, %v827
    %831 = vrot.lane.b32.xlu0 %v829, 64
    %v832 = vpop.permute.xlu0 %831
    %v834 = vadd.f32 %v824, %v832
    %v835 = vtanh.pop %v834
    %837 = vrot.lane.b32.xlu0 %v835, 64
    %v838 = vpop.permute.xlu0 %837
    %v840 = vmul.f32 %v823, %v838
    %841 = vst.msk [vmem:[#allocation3 + $0x28] sm:$0xff] %vm203, %v840
    %842 = vst.msk [vmem:[#allocation4 + $0x10] sm:$0xff] %vm203, %v840
    %v843 = vld [vmem:[#allocation2 + $0x60] sm:$0xff]
    %v844 = vld [vmem:[#allocation2 + $0x68] sm:$0xff]
    %v845 = vpack.c.bf16 %v840, %v840
    %v847 = vsel %vm203, %v845, 0
    %849 = vmatpush.bf16.msra.mxu0 0
    %850 = vmatpush.bf16.msra.mxu0 0
    %851 = vmatpush.bf16.msra.mxu0 0
    %852 = vmatpush.bf16.msra.mxu0 0
    %853 = vmatpush.bf16.msra.mxu0 %v541
    %854 = vmatpush.bf16.msra.mxu0 %v539
    %855 = vmatpush.bf16.msra.mxu0 %v537
    %856 = vmatpush.bf16.msra.mxu0 %v535
    %857 = vmatmul.bf16.gmra.mxu0 %v847
    %v858 = vpop.f32.mrf.mxu0
    %v859 = vadd.f32 %v843, %v858
    %v860 = vpop.f32.mrf.mxu0
    %861 = vdwg.mxu0
    %862 = vmatpush.bf16.msra.mxu0 0
    %863 = vmatpush.bf16.msra.mxu0 0
    %864 = vmatpush.bf16.msra.mxu0 0
    %865 = vmatpush.bf16.msra.mxu0 0
    %866 = vmatpush.bf16.msra.mxu0 %v542
    %867 = vmatpush.bf16.msra.mxu0 %v540
    %868 = vmatpush.bf16.msra.mxu0 %v538
    %869 = vmatpush.bf16.msra.mxu0 %v536
    %870 = vmatmul.bf16.gmra.mxu0 %v847
    %v871 = vpop.f32.mrf.mxu0
    %v872 = vadd.f32 %v844, %v871
    %v873 = vpop.f32.mrf.mxu0
    %874 = vdwg.mxu0
    %v875 = vmul.f32 %v859, %v467
    %v876 = vmul.f32 %v872, %v468
    %v877 = vtanh.pop %v875
    %v878 = vtanh.pop %v876
    %v879 = vmul.f32 %v877, %v467
    %v880 = vmul.f32 %v878, %v468
    %v881 = vadd.f32 %v879, %v469
    %v882 = vadd.f32 %v880, %v470
    %v883 = vmul.f32 %v881, %v834
    %885 = vrot.lane.b32.xlu0 %v882, 64
    %v886 = vpop.permute.xlu0 %885
    %v888 = vmul.f32 %v881, %v886
    %890 = vrot.lane.b32.xlu0 %v888, 64
    %v891 = vpop.permute.xlu0 %890
    %v893 = vadd.f32 %v883, %v891
    %v894 = vtanh.pop %v893
    %896 = vrot.lane.b32.xlu0 %v894, 64
    %v897 = vpop.permute.xlu0 %896
    %v899 = vmul.f32 %v882, %v897
    %900 = vst.msk [vmem:[#allocation3 + $0x30] sm:$0xff] %vm203, %v899
    %901 = vst.msk [vmem:[#allocation4 + $0x8] sm:$0xff] %vm203, %v899
    %v902 = vld [vmem:[#allocation2 + $0x70] sm:$0xff]
    %v903 = vld [vmem:[#allocation2 + $0x78] sm:$0xff]
    %v904 = vpack.c.bf16 %v899, %v899
    %v906 = vsel %vm203, %v904, 0
    %908 = vmatpush.bf16.msra.mxu0 0
    %909 = vmatpush.bf16.msra.mxu0 0
    %910 = vmatpush.bf16.msra.mxu0 0
    %911 = vmatpush.bf16.msra.mxu0 0
    %912 = vmatpush.bf16.msra.mxu0 %v541
    %913 = vmatpush.bf16.msra.mxu0 %v539
    %914 = vmatpush.bf16.msra.mxu0 %v537
    %915 = vmatpush.bf16.msra.mxu0 %v535
    %916 = vmatmul.bf16.gmra.mxu0 %v906
    %v917 = vpop.f32.mrf.mxu0
    %v918 = vadd.f32 %v902, %v917
    %v919 = vpop.f32.mrf.mxu0
    %920 = vdwg.mxu0
    %921 = vmatpush.bf16.msra.mxu0 0
    %922 = vmatpush.bf16.msra.mxu0 0
    %923 = vmatpush.bf16.msra.mxu0 0
    %924 = vmatpush.bf16.msra.mxu0 0
    %925 = vmatpush.bf16.msra.mxu0 %v542
    %926 = vmatpush.bf16.msra.mxu0 %v540
    %927 = vmatpush.bf16.msra.mxu0 %v538
    %928 = vmatpush.bf16.msra.mxu0 %v536
    %929 = vmatmul.bf16.gmra.mxu0 %v906
    %v930 = vpop.f32.mrf.mxu0
    %v931 = vadd.f32 %v903, %v930
    %v932 = vpop.f32.mrf.mxu0
    %933 = vdwg.mxu0
    %v934 = vmul.f32 %v918, %v467
    %v935 = vmul.f32 %v931, %v468
    %v936 = vtanh.pop %v934
    %v937 = vtanh.pop %v935
    %v938 = vmul.f32 %v936, %v467
    %v939 = vmul.f32 %v937, %v468
    %v940 = vadd.f32 %v938, %v469
    %v941 = vadd.f32 %v939, %v470
    %v942 = vmul.f32 %v940, %v893
    %944 = vrot.lane.b32.xlu0 %v941, 64
    %v945 = vpop.permute.xlu0 %944
    %v947 = vmul.f32 %v940, %v945
    %949 = vrot.lane.b32.xlu0 %v947, 64
    %v950 = vpop.permute.xlu0 %949
    %v952 = vadd.f32 %v942, %v950
    %v953 = vtanh.pop %v952
    %955 = vrot.lane.b32.xlu0 %v953, 64
    %v956 = vpop.permute.xlu0 %955
    %v958 = vmul.f32 %v941, %v956
    %959 = vst.msk [vmem:[#allocation3 + $0x38] sm:$0xff] %vm203, %v958
    %960 = vst.msk [vmem:[#allocation4] sm:$0xff] %vm203, %v958
    %v961 = vld [vmem:[#allocation3] sm:$0xff]
    %v962 = vld [vmem:[#allocation3 + $0x8] sm:$0xff]
    %v963 = vld [vmem:[#allocation3 + $0x10] sm:$0xff]
    %v964 = vld [vmem:[#allocation3 + $0x18] sm:$0xff]
    %v965 = vld [vmem:[#allocation3 + $0x20] sm:$0xff]
    %v966 = vld [vmem:[#allocation3 + $0x28] sm:$0xff]
    %v967 = vld [vmem:[#allocation3 + $0x30] sm:$0xff]
    %v968 = vld [vmem:[#allocation3 + $0x38] sm:$0xff]
    %v969 = vmax.f32 %v961, 0.0
    %v970 = vmax.f32 %v962, 0.0
    %v971 = vmax.f32 %v963, 0.0
    %v972 = vmax.f32 %v964, 0.0
    %v973 = vmax.f32 %v965, 0.0
    %v974 = vmax.f32 %v966, 0.0
    %v975 = vmax.f32 %v967, 0.0
    %v976 = vmax.f32 %v968, 0.0
    %v977 = vld [vmem:[#allocation9] sm:$0xff]
    %v978 = vld [vmem:[#allocation9 + $0x8] sm:$0xff]
    %v979 = vld [vmem:[#allocation9 + $0x10] sm:$0xff]
    %v980 = vld [vmem:[#allocation9 + $0x18] sm:$0xff]
    %v981 = vld [vmem:[#allocation9 + $0x20] sm:$0xff]
    %v982 = vld [vmem:[#allocation9 + $0x28] sm:$0xff]
    %v983 = vld [vmem:[#allocation9 + $0x30] sm:$0xff]
    %v984 = vld [vmem:[#allocation9 + $0x38] sm:$0xff]
    %v985 = vld [vmem:[#allocation4] sm:$0xff]
    %v986 = vld [vmem:[#allocation4 + $0x8] sm:$0xff]
    %v987 = vld [vmem:[#allocation4 + $0x10] sm:$0xff]
    %v988 = vld [vmem:[#allocation4 + $0x18] sm:$0xff]
    %v989 = vld [vmem:[#allocation4 + $0x20] sm:$0xff]
    %v990 = vld [vmem:[#allocation4 + $0x28] sm:$0xff]
    %v991 = vld [vmem:[#allocation4 + $0x30] sm:$0xff]
    %v992 = vld [vmem:[#allocation4 + $0x38] sm:$0xff]
    %v993 = vmax.f32 %v985, 0.0
    %v994 = vmax.f32 %v986, 0.0
    %v995 = vmax.f32 %v987, 0.0
    %v996 = vmax.f32 %v988, 0.0
    %v997 = vmax.f32 %v989, 0.0
    %v998 = vmax.f32 %v990, 0.0
    %v999 = vmax.f32 %v991, 0.0
    %v1000 = vmax.f32 %v992, 0.0
    %v1001 = vld [vmem:[#allocation10] sm:$0xff]
    %v1002 = vld [vmem:[#allocation10 + $0x8] sm:$0xff]
    %v1003 = vld [vmem:[#allocation10 + $0x10] sm:$0xff]
    %v1004 = vld [vmem:[#allocation10 + $0x18] sm:$0xff]
    %v1005 = vld [vmem:[#allocation10 + $0x20] sm:$0xff]
    %v1006 = vld [vmem:[#allocation10 + $0x28] sm:$0xff]
    %v1007 = vld [vmem:[#allocation10 + $0x30] sm:$0xff]
    %v1008 = vld [vmem:[#allocation10 + $0x38] sm:$0xff]
    %v1010 = vsel %vm203, %v993, 0
    %v1013 = vsel %vm203, %v994, 0
    %v1016 = vsel %vm203, %v995, 0
    %v1019 = vsel %vm203, %v996, 0
    %v1022 = vsel %vm203, %v997, 0
    %v1025 = vsel %vm203, %v998, 0
    %v1028 = vsel %vm203, %v999, 0
    %v1031 = vsel %vm203, %v1000, 0
    %1033 = vmatpush.msra.mxu0 0.0
    %1034 = vmatpush.msra.mxu0 0.0
    %1035 = vmatpush.msra.mxu0 0.0
    %1036 = vmatpush.msra.mxu0 0.0
    %1037 = vmatpush.msra.mxu0 0.0
    %1038 = vmatpush.msra.mxu0 0.0
    %1039 = vmatpush.msra.mxu0 0.0
    %1040 = vmatpush.msra.mxu0 0.0
    %1041 = vmatpush.msra.mxu0 %v1008
    %1042 = vmatpush.msra.mxu0 %v1007
    %1043 = vmatpush.msra.mxu0 %v1006
    %1044 = vmatpush.msra.mxu0 %v1005
    %1045 = vmatpush.msra.mxu0 %v1004
    %1046 = vmatpush.msra.mxu0 %v1003
    %1047 = vmatpush.msra.mxu0 %v1002
    %1048 = vmatpush.msra.mxu0 %v1001
    %1049 = vmatmul.f32.gmra.mxu0 %v1010
    %v1050 = vpop.f32.mrf.mxu0
    %v1051 = vadd.f32 0.0, %v1050
    %1052 = vmatmul.f32.gmra.mxu0 %v1013
    %v1053 = vpop.f32.mrf.mxu0
    %v1054 = vadd.f32 0.0, %v1053
    %1055 = vmatmul.f32.gmra.mxu0 %v1016
    %v1056 = vpop.f32.mrf.mxu0
    %v1057 = vadd.f32 0.0, %v1056
    %1058 = vmatmul.f32.gmra.mxu0 %v1019
    %v1059 = vpop.f32.mrf.mxu0
    %v1060 = vadd.f32 0.0, %v1059
    %1061 = vmatmul.f32.gmra.mxu0 %v1022
    %v1062 = vpop.f32.mrf.mxu0
    %v1063 = vadd.f32 0.0, %v1062
    %1064 = vmatmul.f32.gmra.mxu0 %v1025
    %v1065 = vpop.f32.mrf.mxu0
    %v1066 = vadd.f32 0.0, %v1065
    %1067 = vmatmul.f32.gmra.mxu0 %v1028
    %v1068 = vpop.f32.mrf.mxu0
    %v1069 = vadd.f32 0.0, %v1068
    %1070 = vmatmul.f32.gmra.mxu0 %v1031
    %v1071 = vpop.f32.mrf.mxu0
    %v1072 = vadd.f32 0.0, %v1071
    %1073 = vdwg.mxu0
    %v1075 = vsel %vm203, %v969, 0
    %v1078 = vsel %vm203, %v970, 0
    %v1081 = vsel %vm203, %v971, 0
    %v1084 = vsel %vm203, %v972, 0
    %v1087 = vsel %vm203, %v973, 0
    %v1090 = vsel %vm203, %v974, 0
    %v1093 = vsel %vm203, %v975, 0
    %v1096 = vsel %vm203, %v976, 0
    %1098 = vmatpush.msra.mxu0 0.0
    %1099 = vmatpush.msra.mxu0 0.0
    %1100 = vmatpush.msra.mxu0 0.0
    %1101 = vmatpush.msra.mxu0 0.0
    %1102 = vmatpush.msra.mxu0 0.0
    %1103 = vmatpush.msra.mxu0 0.0
    %1104 = vmatpush.msra.mxu0 0.0
    %1105 = vmatpush.msra.mxu0 0.0
    %1106 = vmatpush.msra.mxu0 %v984
    %1107 = vmatpush.msra.mxu0 %v983
    %1108 = vmatpush.msra.mxu0 %v982
    %1109 = vmatpush.msra.mxu0 %v981
    %1110 = vmatpush.msra.mxu0 %v980
    %1111 = vmatpush.msra.mxu0 %v979
    %1112 = vmatpush.msra.mxu0 %v978
    %1113 = vmatpush.msra.mxu0 %v977
    %1114 = vmatmul.f32.gmra.mxu0 %v1075
    %v1115 = vpop.f32.mrf.mxu0
    %v1116 = vadd.f32 %v1051, %v1115
    %1117 = vmatmul.f32.gmra.mxu0 %v1078
    %v1118 = vpop.f32.mrf.mxu0
    %v1119 = vadd.f32 %v1054, %v1118
    %1120 = vmatmul.f32.gmra.mxu0 %v1081
    %v1121 = vpop.f32.mrf.mxu0
    %v1122 = vadd.f32 %v1057, %v1121
    %1123 = vmatmul.f32.gmra.mxu0 %v1084
    %v1124 = vpop.f32.mrf.mxu0
    %v1125 = vadd.f32 %v1060, %v1124
    %1126 = vmatmul.f32.gmra.mxu0 %v1087
    %v1127 = vpop.f32.mrf.mxu0
    %v1128 = vadd.f32 %v1063, %v1127
    %1129 = vmatmul.f32.gmra.mxu0 %v1090
    %v1130 = vpop.f32.mrf.mxu0
    %v1131 = vadd.f32 %v1066, %v1130
    %1132 = vmatmul.f32.gmra.mxu0 %v1093
    %v1133 = vpop.f32.mrf.mxu0
    %v1134 = vadd.f32 %v1069, %v1133
    %1135 = vmatmul.f32.gmra.mxu0 %v1096
    %v1136 = vpop.f32.mrf.mxu0
    %v1137 = vadd.f32 %v1072, %v1136
    %1138 = vdwg.mxu0
    %v1139 = vld [vmem:[%s9] sm:$0x1]
    %v1141 = vperm.slane %v1139, 0
    %v1143 = vadd.f32 %v1116, %v1141
    %v1144 = vadd.f32 %v1119, %v1141
    %v1145 = vadd.f32 %v1122, %v1141
    %v1146 = vadd.f32 %v1125, %v1141
    %v1147 = vadd.f32 %v1128, %v1141
    %v1148 = vadd.f32 %v1131, %v1141
    %v1149 = vadd.f32 %v1134, %v1141
    %v1150 = vadd.f32 %v1137, %v1141
    %vm1151 = vcmp.lt.s32.totalorder %v463, 4
    %vm1152 = vcmp.ge.s32.totalorder %v463, 4
    %vm1153 = vcmp.lt.s32.totalorder %v463, 9
    %vm1154 = vmand %vm1152, %vm1153
    %v1155 = vsel %vm1154, %v1143, -1e+30
    %v1156 = vsel %vm1154, %v1144, -1e+30
    %v1157 = vsel %vm1154, %v1145, -1e+30
    %v1158 = vsel %vm1154, %v1146, -1e+30
    %v1159 = vsel %vm1154, %v1147, -1e+30
    %v1160 = vsel %vm1154, %v1148, -1e+30
    %v1161 = vsel %vm1154, %v1149, -1e+30
    %v1162 = vsel %vm1154, %v1150, -1e+30
    %1163 = vmax.xlane.f32.xlu0 %v1155
    %v1164 = vpop.xlane.xlu0 %1163
    %1165 = vmax.xlane.f32.xlu0 %v1156
    %v1166 = vpop.xlane.xlu0 %1165
    %1167 = vmax.xlane.f32.xlu0 %v1157
    %v1168 = vpop.xlane.xlu0 %1167
    %1169 = vmax.xlane.f32.xlu0 %v1158
    %v1170 = vpop.xlane.xlu0 %1169
    %1171 = vmax.xlane.f32.xlu0 %v1159
    %v1172 = vpop.xlane.xlu0 %1171
    %1173 = vmax.xlane.f32.xlu0 %v1160
    %v1174 = vpop.xlane.xlu0 %1173
    %1175 = vmax.xlane.f32.xlu0 %v1161
    %v1176 = vpop.xlane.xlu0 %1175
    %1177 = vmax.xlane.f32.xlu0 %v1162
    %v1178 = vpop.xlane.xlu0 %1177
    %v1179 = vsub.f32 %v1155, %v1164
    %v1180 = vsub.f32 %v1156, %v1166
    %v1181 = vsub.f32 %v1157, %v1168
    %v1182 = vsub.f32 %v1158, %v1170
    %v1183 = vsub.f32 %v1159, %v1172
    %v1184 = vsub.f32 %v1160, %v1174
    %v1185 = vsub.f32 %v1161, %v1176
    %v1186 = vsub.f32 %v1162, %v1178
    %v1187 = vmul.f32 %v1179, 1.442695
    %v1188 = vpow.pop %v1187
    %v1189 = vmul.f32 %v1180, 1.442695
    %v1190 = vpow.pop %v1189
    %v1191 = vmul.f32 %v1181, 1.442695
    %v1192 = vpow.pop %v1191
    %v1193 = vmul.f32 %v1182, 1.442695
    %v1194 = vpow.pop %v1193
    %v1195 = vmul.f32 %v1183, 1.442695
    %v1196 = vpow.pop %v1195
    %v1197 = vmul.f32 %v1184, 1.442695
    %v1198 = vpow.pop %v1197
    %v1199 = vmul.f32 %v1185, 1.442695
    %v1200 = vpow.pop %v1199
    %v1201 = vmul.f32 %v1186, 1.442695
    %v1202 = vpow.pop %v1201
    %1203 = vadd.xlane.f32.xlu0 %v1188
    %v1204 = vpop.xlane.xlu0 %1203
    %1205 = vadd.xlane.f32.xlu0 %v1190
    %v1206 = vpop.xlane.xlu0 %1205
    %1207 = vadd.xlane.f32.xlu0 %v1192
    %v1208 = vpop.xlane.xlu0 %1207
    %1209 = vadd.xlane.f32.xlu0 %v1194
    %v1210 = vpop.xlane.xlu0 %1209
    %1211 = vadd.xlane.f32.xlu0 %v1196
    %v1212 = vpop.xlane.xlu0 %1211
    %1213 = vadd.xlane.f32.xlu0 %v1198
    %v1214 = vpop.xlane.xlu0 %1213
    %1215 = vadd.xlane.f32.xlu0 %v1200
    %v1216 = vpop.xlane.xlu0 %1215
    %1217 = vadd.xlane.f32.xlu0 %v1202
    %v1218 = vpop.xlane.xlu0 %1217
    %v1219 = vrcp.pop %v1204
    %v1220 = vrcp.pop %v1206
    %v1221 = vrcp.pop %v1208
    %v1222 = vrcp.pop %v1210
    %v1223 = vrcp.pop %v1212
    %v1224 = vrcp.pop %v1214
    %v1225 = vrcp.pop %v1216
    %v1226 = vrcp.pop %v1218
    %v1227 = vmul.f32 %v1204, %v1219
    %v1228 = vmul.f32 %v1206, %v1220
    %v1229 = vmul.f32 %v1208, %v1221
    %v1230 = vmul.f32 %v1210, %v1222
    %v1231 = vmul.f32 %v1212, %v1223
    %v1232 = vmul.f32 %v1214, %v1224
    %v1233 = vmul.f32 %v1216, %v1225
    %v1234 = vmul.f32 %v1218, %v1226
    %v1235 = vsub.f32 2.0, %v1227
    %v1236 = vsub.f32 2.0, %v1228
    %v1237 = vsub.f32 2.0, %v1229
    %v1238 = vsub.f32 2.0, %v1230
    %v1239 = vsub.f32 2.0, %v1231
    %v1240 = vsub.f32 2.0, %v1232
    %v1241 = vsub.f32 2.0, %v1233
    %v1242 = vsub.f32 2.0, %v1234
    %v1243 = vmul.f32 %v1219, %v1235
    %v1244 = vmul.f32 %v1220, %v1236
    %v1245 = vmul.f32 %v1221, %v1237
    %v1246 = vmul.f32 %v1222, %v1238
    %v1247 = vmul.f32 %v1223, %v1239
    %v1248 = vmul.f32 %v1224, %v1240
    %v1249 = vmul.f32 %v1225, %v1241
    %v1250 = vmul.f32 %v1226, %v1242
    %v1251 = vmul.f32 %v1188, %v1243
    %v1252 = vmul.f32 %v1190, %v1244
    %v1253 = vmul.f32 %v1192, %v1245
    %v1254 = vmul.f32 %v1194, %v1246
    %v1255 = vmul.f32 %v1196, %v1247
    %v1256 = vmul.f32 %v1198, %v1248
    %v1257 = vmul.f32 %v1200, %v1249
    %v1258 = vmul.f32 %v1202, %v1250
    %v1259 = vtanh.pop %v1143
    %v1260 = vtanh.pop %v1144
    %v1261 = vtanh.pop %v1145
    %v1262 = vtanh.pop %v1146
    %v1263 = vtanh.pop %v1147
    %v1264 = vtanh.pop %v1148
    %v1265 = vtanh.pop %v1149
    %v1266 = vtanh.pop %v1150
    %v1267 = vsel %vm1154, %v1251, %v1143
    %v1268 = vsel %vm1154, %v1252, %v1144
    %v1269 = vsel %vm1154, %v1253, %v1145
    %v1270 = vsel %vm1154, %v1254, %v1146
    %v1271 = vsel %vm1154, %v1255, %v1147
    %v1272 = vsel %vm1154, %v1256, %v1148
    %v1273 = vsel %vm1154, %v1257, %v1149
    %v1274 = vsel %vm1154, %v1258, %v1150
    %v1275 = vsel %vm1151, %v1259, %v1267
    %v1276 = vsel %vm1151, %v1260, %v1268
    %v1277 = vsel %vm1151, %v1261, %v1269
    %v1278 = vsel %vm1151, %v1262, %v1270
    %v1279 = vsel %vm1151, %v1263, %v1271
    %v1280 = vsel %vm1151, %v1264, %v1272
    %v1281 = vsel %vm1151, %v1265, %v1273
    %v1282 = vsel %vm1151, %v1266, %v1274
    %1283 = vst [vmem:[%s10] sm:$0xff] %v1275
    %1284 = vst [vmem:[%s10 + $0x8] sm:$0xff] %v1276
    %1285 = vst [vmem:[%s10 + $0x10] sm:$0xff] %v1277
    %1286 = vst [vmem:[%s10 + $0x18] sm:$0xff] %v1278
    %1287 = vst [vmem:[%s10 + $0x20] sm:$0xff] %v1279
    %1288 = vst [vmem:[%s10 + $0x28] sm:$0xff] %v1280
    %1289 = vst [vmem:[%s10 + $0x30] sm:$0xff] %v1281
    %1290 = vst [vmem:[%s10 + $0x38] sm:$0xff] %v1282
    // Predicated region
    $region58: #{actor_forward_pallas.1} parent=1 // pred_check
      _
    $region59: #{actor_forward_pallas.1} parent=1 // pred_check_branch
      %1292 = sbr.rel (0) target = $region61
    $region60: #{actor_forward_pallas.1} parent=1 // pred_region
      _
    $region61: #{actor_forward_pallas.1} parent=1 // pred_fallthru
      _
    // Predicated region
    $region62: #{actor_forward_pallas.1} parent=1 // pred_check
      _
    $region63: #{actor_forward_pallas.1} parent=1 // pred_check_branch
      %1294 = sbr.rel (0) target = $region65
    $region64: #{actor_forward_pallas.1} parent=1 // pred_region
      _
    $region65: #{actor_forward_pallas.1} parent=1 // pred_fallthru
      _
    %1295 = vsyncpa [#allocation6], 1
    %1296 = vsyncpa [#allocation8], 1
    %1297 = vsyncpa [#allocation11], 1

</llo_original>
